<compile_context>
chip_gen: v7x
topology: tpu7x:2x2x1
jax: 0.10.0
libtpu: 0.0.40
codegen_flags: <defaults>
</compile_context>

<pallas_src>
import functools

import jax
import jax.numpy as jnp
from jax.experimental import pallas as pl
from jax.experimental.pallas import tpu as pltpu

NEG_SLOPE = 0.2          # LeakyReLU negative slope (module default)
MASK_NEG = -1e30         # additive mask for non-edges (f32/bf16-safe sentinel)


def _round_up(x, m):
    return ((x + m - 1) // m) * m


def _gat_kernel(eattr_ref, maskneg_ref, fs_ref, eh_ref, et_ref, wae_ref,
                bias_ref, out_ref, *, n_heads, e_dim, out_pad):
    """One destination-node tile of the GAT forward.

    Block shapes (TD = dst tile, NS = padded #src, H = heads, D = out_dim,
    E = edge-feature dim, OUT_P = padded H*D):
      eattr_ref  : [E, TD, NS]   channel-major edge features (stream dtype)
      maskneg_ref: [TD, NS]      0.0 on edges, -1e30 elsewhere (stream dtype)
      fs_ref     : [H, NS, D]    W_fc-projected source features (stream dtype)
      eh_ref     : [H, NS]       folded attn_h source term (f32)
      et_ref     : [TD, H]       folded attn_t dest term for this tile (f32)
      wae_ref    : [H, E] (SMEM) edge weight with attn_e folded in (f32)
      bias_ref   : [1, OUT_P]
      out_ref    : [TD, OUT_P]
    """
    et = et_ref[...]                                   # [TD, H]
    eh = eh_ref[...]                                   # [H, NS]
    maskneg = maskneg_ref[...].astype(jnp.float32)     # converted once per tile

    # Per-head attention-logit accumulators seeded with eh[src] + et[dst].
    s = [et[:, h:h + 1] + eh[h:h + 1, :] for h in range(n_heads)]

    # Edge-feature contraction, channel-outer: each [TD, NS] channel tile is
    # loaded (and widened from the packed stream dtype) exactly once and then
    # reused by every head's accumulator -> E loads/converts instead of H*E.
    for j in range(e_dim):
        xj = eattr_ref[j].astype(jnp.float32)          # [TD, NS]
        for h in range(n_heads):
            s[h] = s[h] + wae_ref[h, j] * xj

    parts = []
    for h in range(n_heads):
        z = jnp.maximum(s[h], NEG_SLOPE * s[h])        # leaky_relu
        z = z + maskneg                                # single additive mask
        m = jnp.max(z, axis=-1, keepdims=True)         # [TD, 1]
        p = jnp.exp(z - m)                             # masked lanes -> 0
        denom = jnp.sum(p, axis=-1, keepdims=True)     # >= 1, never 0
        # Aggregate first (native low-precision MXU matmul when the stream
        # dtype is bf16), normalize the small [TD, D] result afterwards.
        acc = jnp.dot(p.astype(fs_ref.dtype), fs_ref[h],
                      preferred_element_type=jnp.float32)
        parts.append(acc * pl.reciprocal(denom, approx=True))
    if out_pad > 0:
        parts.append(jnp.zeros((out_ref.shape[0], out_pad), jnp.float32))
    out_ref[...] = jnp.concatenate(parts, axis=-1) + bias_ref[...]


@functools.partial(jax.jit, static_argnames=("tile_dst", "stream_dtype"))
def gat_forward(feat, edge_attr, adj_mask, w_fc, w_edge, attn_h, attn_t,
                attn_e, bias, *, tile_dst=256, stream_dtype=jnp.bfloat16):
    """Dense GATConv forward.  Returns [N, n_heads * out_dim] (concat_out=True).

    stream_dtype controls the dominant O(N^2) streams (edge features, additive
    mask) and the resident projected-source buffer.  bf16 (default) halves HBM
    traffic and resident VMEM on every chip; all softmax math stays f32 and the
    f32 path remains available for bit-accuracy checks (stream_dtype=float32).
    """
    N, f_in = feat.shape
    H, D = attn_h.shape
    E = edge_attr.shape[-1]
    HD = H * D
    out_p = _round_up(HD, 128)          # lane-dense output tile
    ns_p = _round_up(N, 128)            # lane-dense source axis
    s_bytes = jnp.dtype(stream_dtype).itemsize

    # --- fold the attention vectors into the linear weights (O(params)) -----
    w_eh = jnp.sum(w_fc.reshape(f_in, H, D) * attn_h[None], axis=-1)     # [Fin,H]
    w_et = jnp.sum(w_fc.reshape(f_in, H, D) * attn_t[None], axis=-1)     # [Fin,H]
    wae_t = jnp.sum(w_edge.reshape(E, H, D) * attn_e[None], axis=-1).T   # [H, E]

    # --- tiny O(N) node-side precompute; the kernel owns the O(N^2) part ----
    feat_src = (feat @ w_fc).reshape(N, H, D)     # [N, H, D]
    eh = feat @ w_eh                              # [N, H]
    et = feat @ w_et                              # [N, H]

    # --- dst-tile sizing -----------------------------------------------------
    td = min(tile_dst, _round_up(N, 16))
    td = max(16, (td // 16) * 16)       # bf16-friendly sublane multiple

    try:
        vmem_cap = pltpu.get_tpu_info().vmem_capacity_bytes
    except Exception:                   # conservative fallback (v7x-sized)
        vmem_cap = 64 * 1024 * 1024
    # Use most of VMEM (the old cap//4 effective budget starved the tile size);
    # leave ~16 MiB headroom for compiler/internal scratch.
    vmem_limit = max(32 * 1024 * 1024, vmem_cap - 16 * 1024 * 1024)
    budget = int(vmem_limit * 0.9)

    def tile_bytes(t):
        streamed = 2 * (E * t * ns_p * s_bytes    # edge features (double-buffered)
                        + t * ns_p * s_bytes      # additive mask
                        + t * H * 4               # et tile
                        + t * out_p * 4)          # output tile
        resident = 2 * (H * ns_p * D * s_bytes    # feat_src (default pipelining
                        + H * ns_p * 4            #   still double-buffers these)
                        + out_p * 4)              # bias
        temps = (H + 4) * t * ns_p * 4            # H live logit accums + xj/p/z
        return streamed + resident + temps

    while td > 16 and tile_bytes(td) > budget:
        td -= 16
    # TODO(synk): add a source-block ("arbitrary") grid axis with flash-style
    # online softmax so fs/eh need not stay fully resident and very large N
    # still fits v7x's 64 MiB VMEM (today td bottoms out at 16 with no fallback).
    # TODO(synk): once pl.Buffered(1) is exercised in CI, single-buffer the
    # constant blocks (fs/eh/bias) via pipeline_mode to reclaim their 2x VMEM.

    # megacore (v7x): keep at least two dst tiles so the "parallel" axis can be
    # sharded across both TensorCores.
    if N > 16 and -(-N // td) < 2:
        td = max(16, _round_up(-(-N // 2), 16))
    nd_p = _round_up(N, td)

    # --- pad / re-layout inputs for lane-dense kernel access ----------------
    # TODO(synk): have the producer emit channel-major [E, N, N] edge features
    # (or cache this re-layout across calls) to skip one full HBM pass; the
    # bf16 cast is fused into this pass so at least the write is half-size.
    eattr_cm = jnp.pad(jnp.transpose(edge_attr, (2, 0, 1)),
                       ((0, 0), (0, nd_p - N), (0, ns_p - N))).astype(stream_dtype)
    maskneg = jnp.where(adj_mask > 0, 0.0, MASK_NEG).astype(stream_dtype)
    maskneg = jnp.pad(maskneg, ((0, nd_p - N), (0, ns_p - N)),
                      constant_values=MASK_NEG)
    fs_ht = jnp.pad(jnp.transpose(feat_src, (1, 0, 2)),
                    ((0, 0), (0, ns_p - N), (0, 0))).astype(stream_dtype)  # [H,NS,D]
    eh_t = jnp.pad(eh.T, ((0, 0), (0, ns_p - N)))                          # [H,NS]
    et_d = jnp.pad(et, ((0, nd_p - N), (0, 0)))                            # [ND,H]
    bias_row = jnp.pad(bias.reshape(1, HD), ((0, 0), (0, out_p - HD)))

    grid = (nd_p // td,)
    kernel = functools.partial(_gat_kernel, n_heads=H, e_dim=E,
                               out_pad=out_p - HD)
    out_padded = pl.pallas_call(
        kernel,
        out_shape=jax.ShapeDtypeStruct((nd_p, out_p), jnp.float32),
        grid=grid,
        in_specs=[
            pl.BlockSpec((E, td, ns_p), lambda i: (0, i, 0)),    # edge features (streamed)
            pl.BlockSpec((td, ns_p), lambda i: (i, 0)),          # additive mask (streamed)
            pl.BlockSpec((H, ns_p, D), lambda i: (0, 0, 0)),     # feat_src (resident)
            pl.BlockSpec((H, ns_p), lambda i: (0, 0)),           # eh (resident)
            pl.BlockSpec((td, H), lambda i: (i, 0)),             # et tile
            pl.BlockSpec(memory_space=pltpu.MemorySpace.SMEM),   # folded edge weight
            pl.BlockSpec((1, out_p), lambda i: (0, 0)),          # bias (resident)
        ],
        out_specs=pl.BlockSpec((td, out_p), lambda i: (i, 0)),
        compiler_params=pltpu.CompilerParams(
            dimension_semantics=("parallel",),   # dst tiles are independent
            vmem_limit_bytes=int(vmem_limit)),
    )(eattr_cm, maskneg, fs_ht, eh_t, et_d, wae_t, bias_row)

    return out_padded[:N, :HD]


def gat_reference(feat, edge_attr, adj_mask, w_fc, w_edge, attn_h, attn_t,
                  attn_e, bias):
    """Pure-JAX f32 reference of the same dense GATConv forward."""
    N = feat.shape[0]
    H, D = attn_h.shape
    feat_src = (feat @ w_fc).reshape(N, H, D)
    eh = jnp.sum(feat_src * attn_h[None], axis=-1)
    et = jnp.sum(feat_src * attn_t[None], axis=-1)
    feat_edge = (edge_attr.reshape(N * N, -1) @ w_edge).reshape(N, N, H, D)
    ee = jnp.sum(feat_edge * attn_e[None, None], axis=-1)
    logits = eh[None, :, :] + ee + et[:, None, :]
    logits = jnp.where(logits >= 0, logits, NEG_SLOPE * logits)
    m3 = adj_mask[:, :, None]
    logits = jnp.where(m3 > 0, logits, MASK_NEG)
    mx = jnp.max(logits, axis=1, keepdims=True)
    p = jnp.exp(logits - mx) * m3
    a = p / jnp.sum(p, axis=1, keepdims=True)
    rst = jnp.einsum('dsh,shk->dhk', a, feat_src) + bias[None]
    return rst.reshape(N, H * D)


if __name__ == "__main__":
    # Small deterministic problem: N=40 nodes, in_dim=16, e_dim=8, out_dim=16,
    # n_heads=4.  The default tile sizing produces a 2-step grid (td=32 after
    # the megacore rule), exercising tiling + padding.
    N, F_IN, E_DIM, H, D = 40, 16, 8, 4, 16

    key = jax.random.PRNGKey(0)
    ks = jax.random.split(key, 8)

    def xavier(k, shape, fan_in, fan_out, gain=jnp.sqrt(2.0)):
        std = gain * jnp.sqrt(2.0 / (fan_in + fan_out))
        return (std * jax.random.normal(k, shape)).astype(jnp.float32)

    feat = jax.random.normal(ks[0], (N, F_IN), dtype=jnp.float32)
    edge_attr = jax.random.normal(ks[1], (N, N, E_DIM), dtype=jnp.float32)
    # adjacency with guaranteed self-loops so every dst has in-degree >= 1
    adj = (jax.random.uniform(ks[2], (N, N)) < 0.3).astype(jnp.float32)
    adj = jnp.maximum(adj, jnp.eye(N, dtype=jnp.float32))

    # parameters (synthetic init mirroring reset_parameters shapes)
    w_fc = xavier(ks[3], (F_IN, H * D), F_IN, H * D)      # fc.weight^T
    w_edge = xavier(ks[4], (E_DIM, H * D), E_DIM, H * D)  # edge_fc.weight^T
    attn_h = xavier(ks[5], (H, D), 1, H * D)
    attn_t = xavier(ks[6], (H, D), 1, H * D)
    attn_e = xavier(ks[7], (H, D), 1, H * D)
    bias = jnp.zeros((H, D), dtype=jnp.float32)           # init.constant_(bias, 0)

    ref = gat_reference(feat, edge_attr, adj, w_fc, w_edge, attn_h, attn_t,
                        attn_e, bias)

    # 1) f32-stream path: only the approx reciprocal deviates from the exact
    #    reference -> tight tolerance.
    out_f32 = gat_forward(feat, edge_attr, adj, w_fc, w_edge, attn_h, attn_t,
                          attn_e, bias, stream_dtype=jnp.float32)
    out_f32 = jax.block_until_ready(out_f32)
    assert out_f32.shape == (N, H * D)
    assert jnp.allclose(out_f32, ref, atol=5e-3, rtol=5e-3), \
        "f32-stream mismatch vs JAX reference"

    # 2) default fast path: bf16 edge/mask/feat streams + bf16 MXU aggregation.
    #    The bf16 stream rounding and the approximate reciprocal stack, hence
    #    the looser (documented) tolerance.
    out = gat_forward(feat, edge_attr, adj, w_fc, w_edge, attn_h, attn_t,
                      attn_e, bias)
    out = jax.block_until_ready(out)
    assert out.shape == (N, H * D)
    assert jnp.allclose(out, ref, atol=3e-2, rtol=3e-2), \
        "bf16-stream mismatch vs JAX reference"

    print("KERNEL_OK")
</pallas_src>

<mosaic_0001>
module attributes {stable_mosaic.version = 11 : i64} {
  func.func @_gat_kernel(%arg0: i32, %arg1: memref<8x32x128xf32, #tpu.memory_space<vmem>>, %arg2: memref<32x128xf32, #tpu.memory_space<vmem>>, %arg3: memref<4x128x16xf32, #tpu.memory_space<vmem>>, %arg4: memref<4x128xf32, #tpu.memory_space<vmem>>, %arg5: memref<32x4xf32, #tpu.memory_space<vmem>>, %arg6: memref<4x8xf32, #tpu.memory_space<smem>>, %arg7: memref<1x128xf32, #tpu.memory_space<vmem>>, %arg8: memref<32x128xf32, #tpu.memory_space<vmem>>) attributes {dimension_semantics = [#tpu.dimension_semantics<parallel>], iteration_bounds = array<i64: 2>, scalar_prefetch = 0 : i64, scratch_operands = 0 : i64, tpu.core_type = #tpu.core_type<tc>, window_params = [{transform_indices = @transform_0, window_bounds = array<i64: 8, 32, 128>}, {transform_indices = @transform_1, window_bounds = array<i64: 32, 128>}, {pipeline_mode = #tpu.pipeline_mode<synchronous>, transform_indices = @transform_2, window_bounds = array<i64: 4, 128, 16>}, {pipeline_mode = #tpu.pipeline_mode<synchronous>, transform_indices = @transform_3, window_bounds = array<i64: 4, 128>}, {transform_indices = @transform_4, window_bounds = array<i64: 32, 4>}, {transform_indices = @transform_5, window_bounds = array<i64: 4, 8>}, {pipeline_mode = #tpu.pipeline_mode<synchronous>, transform_indices = @transform_6, window_bounds = array<i64: 1, 128>}, {transform_indices = @transform_7, window_bounds = array<i64: 32, 128>}]} {
    %c0 = arith.constant 0 : index
    %c0_0 = arith.constant 0 : index
    %0 = vector.load %arg5[%c0, %c0_0] : memref<32x4xf32, #tpu.memory_space<vmem>>, vector<32x4xf32>
    %c0_1 = arith.constant 0 : index
    %c0_2 = arith.constant 0 : index
    %1 = vector.load %arg4[%c0_1, %c0_2] : memref<4x128xf32, #tpu.memory_space<vmem>>, vector<4x128xf32>
    %c0_3 = arith.constant 0 : index
    %c0_4 = arith.constant 0 : index
    %2 = vector.load %arg2[%c0_3, %c0_4] : memref<32x128xf32, #tpu.memory_space<vmem>>, vector<32x128xf32>
    %3 = vector.extract_strided_slice %0 {offsets = [0, 0], sizes = [32, 1], strides = [1, 1]} : vector<32x4xf32> to vector<32x1xf32>
    %4 = vector.extract_strided_slice %1 {offsets = [0, 0], sizes = [1, 128], strides = [1, 1]} : vector<4x128xf32> to vector<1x128xf32>
    %5 = vector.broadcast %3 : vector<32x1xf32> to vector<32x128xf32>
    %6 = vector.broadcast %4 : vector<1x128xf32> to vector<32x128xf32>
    %7 = arith.addf %5, %6 : vector<32x128xf32>
    %8 = vector.extract_strided_slice %0 {offsets = [0, 1], sizes = [32, 1], strides = [1, 1]} : vector<32x4xf32> to vector<32x1xf32>
    %9 = vector.extract_strided_slice %1 {offsets = [1, 0], sizes = [1, 128], strides = [1, 1]} : vector<4x128xf32> to vector<1x128xf32>
    %10 = vector.broadcast %8 : vector<32x1xf32> to vector<32x128xf32>
    %11 = vector.broadcast %9 : vector<1x128xf32> to vector<32x128xf32>
    %12 = arith.addf %10, %11 : vector<32x128xf32>
    %13 = vector.extract_strided_slice %0 {offsets = [0, 2], sizes = [32, 1], strides = [1, 1]} : vector<32x4xf32> to vector<32x1xf32>
    %14 = vector.extract_strided_slice %1 {offsets = [2, 0], sizes = [1, 128], strides = [1, 1]} : vector<4x128xf32> to vector<1x128xf32>
    %15 = vector.broadcast %13 : vector<32x1xf32> to vector<32x128xf32>
    %16 = vector.broadcast %14 : vector<1x128xf32> to vector<32x128xf32>
    %17 = arith.addf %15, %16 : vector<32x128xf32>
    %18 = vector.extract_strided_slice %0 {offsets = [0, 3], sizes = [32, 1], strides = [1, 1]} : vector<32x4xf32> to vector<32x1xf32>
    %19 = vector.extract_strided_slice %1 {offsets = [3, 0], sizes = [1, 128], strides = [1, 1]} : vector<4x128xf32> to vector<1x128xf32>
    %20 = vector.broadcast %18 : vector<32x1xf32> to vector<32x128xf32>
    %21 = vector.broadcast %19 : vector<1x128xf32> to vector<32x128xf32>
    %22 = arith.addf %20, %21 : vector<32x128xf32>
    %c0_5 = arith.constant 0 : index
    %c0_6 = arith.constant 0 : index
    %c0_7 = arith.constant 0 : index
    %23 = vector.load %arg1[%c0_5, %c0_6, %c0_7] : memref<8x32x128xf32, #tpu.memory_space<vmem>>, vector<1x32x128xf32>
    %24 = vector.shape_cast %23 : vector<1x32x128xf32> to vector<32x128xf32>
    %c0_8 = arith.constant 0 : index
    %c0_9 = arith.constant 0 : index
    %25 = memref.load %arg6[%c0_8, %c0_9] : memref<4x8xf32, #tpu.memory_space<smem>>
    %26 = vector.broadcast %25 : f32 to vector<32x128xf32>
    %27 = arith.mulf %26, %24 : vector<32x128xf32>
    %28 = arith.addf %7, %27 : vector<32x128xf32>
    %c1 = arith.constant 1 : index
    %c0_10 = arith.constant 0 : index
    %29 = memref.load %arg6[%c1, %c0_10] : memref<4x8xf32, #tpu.memory_space<smem>>
    %30 = vector.broadcast %29 : f32 to vector<32x128xf32>
    %31 = arith.mulf %30, %24 : vector<32x128xf32>
    %32 = arith.addf %12, %31 : vector<32x128xf32>
    %c2 = arith.constant 2 : index
    %c0_11 = arith.constant 0 : index
    %33 = memref.load %arg6[%c2, %c0_11] : memref<4x8xf32, #tpu.memory_space<smem>>
    %34 = vector.broadcast %33 : f32 to vector<32x128xf32>
    %35 = arith.mulf %34, %24 : vector<32x128xf32>
    %36 = arith.addf %17, %35 : vector<32x128xf32>
    %c3 = arith.constant 3 : index
    %c0_12 = arith.constant 0 : index
    %37 = memref.load %arg6[%c3, %c0_12] : memref<4x8xf32, #tpu.memory_space<smem>>
    %38 = vector.broadcast %37 : f32 to vector<32x128xf32>
    %39 = arith.mulf %38, %24 : vector<32x128xf32>
    %40 = arith.addf %22, %39 : vector<32x128xf32>
    %c1_13 = arith.constant 1 : index
    %c0_14 = arith.constant 0 : index
    %c0_15 = arith.constant 0 : index
    %41 = vector.load %arg1[%c1_13, %c0_14, %c0_15] : memref<8x32x128xf32, #tpu.memory_space<vmem>>, vector<1x32x128xf32>
    %42 = vector.shape_cast %41 : vector<1x32x128xf32> to vector<32x128xf32>
    %c0_16 = arith.constant 0 : index
    %c1_17 = arith.constant 1 : index
    %43 = memref.load %arg6[%c0_16, %c1_17] : memref<4x8xf32, #tpu.memory_space<smem>>
    %44 = vector.broadcast %43 : f32 to vector<32x128xf32>
    %45 = arith.mulf %44, %42 : vector<32x128xf32>
    %46 = arith.addf %28, %45 : vector<32x128xf32>
    %c1_18 = arith.constant 1 : index
    %c1_19 = arith.constant 1 : index
    %47 = memref.load %arg6[%c1_18, %c1_19] : memref<4x8xf32, #tpu.memory_space<smem>>
    %48 = vector.broadcast %47 : f32 to vector<32x128xf32>
    %49 = arith.mulf %48, %42 : vector<32x128xf32>
    %50 = arith.addf %32, %49 : vector<32x128xf32>
    %c2_20 = arith.constant 2 : index
    %c1_21 = arith.constant 1 : index
    %51 = memref.load %arg6[%c2_20, %c1_21] : memref<4x8xf32, #tpu.memory_space<smem>>
    %52 = vector.broadcast %51 : f32 to vector<32x128xf32>
    %53 = arith.mulf %52, %42 : vector<32x128xf32>
    %54 = arith.addf %36, %53 : vector<32x128xf32>
    %c3_22 = arith.constant 3 : index
    %c1_23 = arith.constant 1 : index
    %55 = memref.load %arg6[%c3_22, %c1_23] : memref<4x8xf32, #tpu.memory_space<smem>>
    %56 = vector.broadcast %55 : f32 to vector<32x128xf32>
    %57 = arith.mulf %56, %42 : vector<32x128xf32>
    %58 = arith.addf %40, %57 : vector<32x128xf32>
    %c2_24 = arith.constant 2 : index
    %c0_25 = arith.constant 0 : index
    %c0_26 = arith.constant 0 : index
    %59 = vector.load %arg1[%c2_24, %c0_25, %c0_26] : memref<8x32x128xf32, #tpu.memory_space<vmem>>, vector<1x32x128xf32>
    %60 = vector.shape_cast %59 : vector<1x32x128xf32> to vector<32x128xf32>
    %c0_27 = arith.constant 0 : index
    %c2_28 = arith.constant 2 : index
    %61 = memref.load %arg6[%c0_27, %c2_28] : memref<4x8xf32, #tpu.memory_space<smem>>
    %62 = vector.broadcast %61 : f32 to vector<32x128xf32>
    %63 = arith.mulf %62, %60 : vector<32x128xf32>
    %64 = arith.addf %46, %63 : vector<32x128xf32>
    %c1_29 = arith.constant 1 : index
    %c2_30 = arith.constant 2 : index
    %65 = memref.load %arg6[%c1_29, %c2_30] : memref<4x8xf32, #tpu.memory_space<smem>>
    %66 = vector.broadcast %65 : f32 to vector<32x128xf32>
    %67 = arith.mulf %66, %60 : vector<32x128xf32>
    %68 = arith.addf %50, %67 : vector<32x128xf32>
    %c2_31 = arith.constant 2 : index
    %c2_32 = arith.constant 2 : index
    %69 = memref.load %arg6[%c2_31, %c2_32] : memref<4x8xf32, #tpu.memory_space<smem>>
    %70 = vector.broadcast %69 : f32 to vector<32x128xf32>
    %71 = arith.mulf %70, %60 : vector<32x128xf32>
    %72 = arith.addf %54, %71 : vector<32x128xf32>
    %c3_33 = arith.constant 3 : index
    %c2_34 = arith.constant 2 : index
    %73 = memref.load %arg6[%c3_33, %c2_34] : memref<4x8xf32, #tpu.memory_space<smem>>
    %74 = vector.broadcast %73 : f32 to vector<32x128xf32>
    %75 = arith.mulf %74, %60 : vector<32x128xf32>
    %76 = arith.addf %58, %75 : vector<32x128xf32>
    %c3_35 = arith.constant 3 : index
    %c0_36 = arith.constant 0 : index
    %c0_37 = arith.constant 0 : index
    %77 = vector.load %arg1[%c3_35, %c0_36, %c0_37] : memref<8x32x128xf32, #tpu.memory_space<vmem>>, vector<1x32x128xf32>
    %78 = vector.shape_cast %77 : vector<1x32x128xf32> to vector<32x128xf32>
    %c0_38 = arith.constant 0 : index
    %c3_39 = arith.constant 3 : index
    %79 = memref.load %arg6[%c0_38, %c3_39] : memref<4x8xf32, #tpu.memory_space<smem>>
    %80 = vector.broadcast %79 : f32 to vector<32x128xf32>
    %81 = arith.mulf %80, %78 : vector<32x128xf32>
    %82 = arith.addf %64, %81 : vector<32x128xf32>
    %c1_40 = arith.constant 1 : index
    %c3_41 = arith.constant 3 : index
    %83 = memref.load %arg6[%c1_40, %c3_41] : memref<4x8xf32, #tpu.memory_space<smem>>
    %84 = vector.broadcast %83 : f32 to vector<32x128xf32>
    %85 = arith.mulf %84, %78 : vector<32x128xf32>
    %86 = arith.addf %68, %85 : vector<32x128xf32>
    %c2_42 = arith.constant 2 : index
    %c3_43 = arith.constant 3 : index
    %87 = memref.load %arg6[%c2_42, %c3_43] : memref<4x8xf32, #tpu.memory_space<smem>>
    %88 = vector.broadcast %87 : f32 to vector<32x128xf32>
    %89 = arith.mulf %88, %78 : vector<32x128xf32>
    %90 = arith.addf %72, %89 : vector<32x128xf32>
    %c3_44 = arith.constant 3 : index
    %c3_45 = arith.constant 3 : index
    %91 = memref.load %arg6[%c3_44, %c3_45] : memref<4x8xf32, #tpu.memory_space<smem>>
    %92 = vector.broadcast %91 : f32 to vector<32x128xf32>
    %93 = arith.mulf %92, %78 : vector<32x128xf32>
    %94 = arith.addf %76, %93 : vector<32x128xf32>
    %c4 = arith.constant 4 : index
    %c0_46 = arith.constant 0 : index
    %c0_47 = arith.constant 0 : index
    %95 = vector.load %arg1[%c4, %c0_46, %c0_47] : memref<8x32x128xf32, #tpu.memory_space<vmem>>, vector<1x32x128xf32>
    %96 = vector.shape_cast %95 : vector<1x32x128xf32> to vector<32x128xf32>
    %c0_48 = arith.constant 0 : index
    %c4_49 = arith.constant 4 : index
    %97 = memref.load %arg6[%c0_48, %c4_49] : memref<4x8xf32, #tpu.memory_space<smem>>
    %98 = vector.broadcast %97 : f32 to vector<32x128xf32>
    %99 = arith.mulf %98, %96 : vector<32x128xf32>
    %100 = arith.addf %82, %99 : vector<32x128xf32>
    %c1_50 = arith.constant 1 : index
    %c4_51 = arith.constant 4 : index
    %101 = memref.load %arg6[%c1_50, %c4_51] : memref<4x8xf32, #tpu.memory_space<smem>>
    %102 = vector.broadcast %101 : f32 to vector<32x128xf32>
    %103 = arith.mulf %102, %96 : vector<32x128xf32>
    %104 = arith.addf %86, %103 : vector<32x128xf32>
    %c2_52 = arith.constant 2 : index
    %c4_53 = arith.constant 4 : index
    %105 = memref.load %arg6[%c2_52, %c4_53] : memref<4x8xf32, #tpu.memory_space<smem>>
    %106 = vector.broadcast %105 : f32 to vector<32x128xf32>
    %107 = arith.mulf %106, %96 : vector<32x128xf32>
    %108 = arith.addf %90, %107 : vector<32x128xf32>
    %c3_54 = arith.constant 3 : index
    %c4_55 = arith.constant 4 : index
    %109 = memref.load %arg6[%c3_54, %c4_55] : memref<4x8xf32, #tpu.memory_space<smem>>
    %110 = vector.broadcast %109 : f32 to vector<32x128xf32>
    %111 = arith.mulf %110, %96 : vector<32x128xf32>
    %112 = arith.addf %94, %111 : vector<32x128xf32>
    %c5 = arith.constant 5 : index
    %c0_56 = arith.constant 0 : index
    %c0_57 = arith.constant 0 : index
    %113 = vector.load %arg1[%c5, %c0_56, %c0_57] : memref<8x32x128xf32, #tpu.memory_space<vmem>>, vector<1x32x128xf32>
    %114 = vector.shape_cast %113 : vector<1x32x128xf32> to vector<32x128xf32>
    %c0_58 = arith.constant 0 : index
    %c5_59 = arith.constant 5 : index
    %115 = memref.load %arg6[%c0_58, %c5_59] : memref<4x8xf32, #tpu.memory_space<smem>>
    %116 = vector.broadcast %115 : f32 to vector<32x128xf32>
    %117 = arith.mulf %116, %114 : vector<32x128xf32>
    %118 = arith.addf %100, %117 : vector<32x128xf32>
    %c1_60 = arith.constant 1 : index
    %c5_61 = arith.constant 5 : index
    %119 = memref.load %arg6[%c1_60, %c5_61] : memref<4x8xf32, #tpu.memory_space<smem>>
    %120 = vector.broadcast %119 : f32 to vector<32x128xf32>
    %121 = arith.mulf %120, %114 : vector<32x128xf32>
    %122 = arith.addf %104, %121 : vector<32x128xf32>
    %c2_62 = arith.constant 2 : index
    %c5_63 = arith.constant 5 : index
    %123 = memref.load %arg6[%c2_62, %c5_63] : memref<4x8xf32, #tpu.memory_space<smem>>
    %124 = vector.broadcast %123 : f32 to vector<32x128xf32>
    %125 = arith.mulf %124, %114 : vector<32x128xf32>
    %126 = arith.addf %108, %125 : vector<32x128xf32>
    %c3_64 = arith.constant 3 : index
    %c5_65 = arith.constant 5 : index
    %127 = memref.load %arg6[%c3_64, %c5_65] : memref<4x8xf32, #tpu.memory_space<smem>>
    %128 = vector.broadcast %127 : f32 to vector<32x128xf32>
    %129 = arith.mulf %128, %114 : vector<32x128xf32>
    %130 = arith.addf %112, %129 : vector<32x128xf32>
    %c6 = arith.constant 6 : index
    %c0_66 = arith.constant 0 : index
    %c0_67 = arith.constant 0 : index
    %131 = vector.load %arg1[%c6, %c0_66, %c0_67] : memref<8x32x128xf32, #tpu.memory_space<vmem>>, vector<1x32x128xf32>
    %132 = vector.shape_cast %131 : vector<1x32x128xf32> to vector<32x128xf32>
    %c0_68 = arith.constant 0 : index
    %c6_69 = arith.constant 6 : index
    %133 = memref.load %arg6[%c0_68, %c6_69] : memref<4x8xf32, #tpu.memory_space<smem>>
    %134 = vector.broadcast %133 : f32 to vector<32x128xf32>
    %135 = arith.mulf %134, %132 : vector<32x128xf32>
    %136 = arith.addf %118, %135 : vector<32x128xf32>
    %c1_70 = arith.constant 1 : index
    %c6_71 = arith.constant 6 : index
    %137 = memref.load %arg6[%c1_70, %c6_71] : memref<4x8xf32, #tpu.memory_space<smem>>
    %138 = vector.broadcast %137 : f32 to vector<32x128xf32>
    %139 = arith.mulf %138, %132 : vector<32x128xf32>
    %140 = arith.addf %122, %139 : vector<32x128xf32>
    %c2_72 = arith.constant 2 : index
    %c6_73 = arith.constant 6 : index
    %141 = memref.load %arg6[%c2_72, %c6_73] : memref<4x8xf32, #tpu.memory_space<smem>>
    %142 = vector.broadcast %141 : f32 to vector<32x128xf32>
    %143 = arith.mulf %142, %132 : vector<32x128xf32>
    %144 = arith.addf %126, %143 : vector<32x128xf32>
    %c3_74 = arith.constant 3 : index
    %c6_75 = arith.constant 6 : index
    %145 = memref.load %arg6[%c3_74, %c6_75] : memref<4x8xf32, #tpu.memory_space<smem>>
    %146 = vector.broadcast %145 : f32 to vector<32x128xf32>
    %147 = arith.mulf %146, %132 : vector<32x128xf32>
    %148 = arith.addf %130, %147 : vector<32x128xf32>
    %c7 = arith.constant 7 : index
    %c0_76 = arith.constant 0 : index
    %c0_77 = arith.constant 0 : index
    %149 = vector.load %arg1[%c7, %c0_76, %c0_77] : memref<8x32x128xf32, #tpu.memory_space<vmem>>, vector<1x32x128xf32>
    %150 = vector.shape_cast %149 : vector<1x32x128xf32> to vector<32x128xf32>
    %c0_78 = arith.constant 0 : index
    %c7_79 = arith.constant 7 : index
    %151 = memref.load %arg6[%c0_78, %c7_79] : memref<4x8xf32, #tpu.memory_space<smem>>
    %152 = vector.broadcast %151 : f32 to vector<32x128xf32>
    %153 = arith.mulf %152, %150 : vector<32x128xf32>
    %154 = arith.addf %136, %153 : vector<32x128xf32>
    %c1_80 = arith.constant 1 : index
    %c7_81 = arith.constant 7 : index
    %155 = memref.load %arg6[%c1_80, %c7_81] : memref<4x8xf32, #tpu.memory_space<smem>>
    %156 = vector.broadcast %155 : f32 to vector<32x128xf32>
    %157 = arith.mulf %156, %150 : vector<32x128xf32>
    %158 = arith.addf %140, %157 : vector<32x128xf32>
    %c2_82 = arith.constant 2 : index
    %c7_83 = arith.constant 7 : index
    %159 = memref.load %arg6[%c2_82, %c7_83] : memref<4x8xf32, #tpu.memory_space<smem>>
    %160 = vector.broadcast %159 : f32 to vector<32x128xf32>
    %161 = arith.mulf %160, %150 : vector<32x128xf32>
    %162 = arith.addf %144, %161 : vector<32x128xf32>
    %c3_84 = arith.constant 3 : index
    %c7_85 = arith.constant 7 : index
    %163 = memref.load %arg6[%c3_84, %c7_85] : memref<4x8xf32, #tpu.memory_space<smem>>
    %164 = vector.broadcast %163 : f32 to vector<32x128xf32>
    %165 = arith.mulf %164, %150 : vector<32x128xf32>
    %166 = arith.addf %148, %165 : vector<32x128xf32>
    %cst = arith.constant 2.000000e-01 : f32
    %167 = vector.broadcast %cst : f32 to vector<32x128xf32>
    %168 = arith.mulf %167, %154 : vector<32x128xf32>
    %169 = arith.maximumf %154, %168 : vector<32x128xf32>
    %170 = arith.addf %169, %2 : vector<32x128xf32>
    %cst_86 = arith.constant dense<0xFF800000> : vector<32xf32>
    %171 = vector.multi_reduction <maximumf>, %170, %cst_86 [1] : vector<32x128xf32> to vector<32xf32>
    %172 = vector.shape_cast %171 : vector<32xf32> to vector<32x1xf32>
    %173 = vector.broadcast %172 : vector<32x1xf32> to vector<32x128xf32>
    %174 = arith.subf %170, %173 : vector<32x128xf32>
    %175 = math.exp %174 : vector<32x128xf32>
    %cst_87 = arith.constant dense<0.000000e+00> : vector<32xf32>
    %176 = vector.multi_reduction <add>, %175, %cst_87 [1] : vector<32x128xf32> to vector<32xf32>
    %177 = vector.shape_cast %176 : vector<32xf32> to vector<32x1xf32>
    %c0_88 = arith.constant 0 : index
    %c0_89 = arith.constant 0 : index
    %c0_90 = arith.constant 0 : index
    %178 = vector.load %arg3[%c0_88, %c0_89, %c0_90] : memref<4x128x16xf32, #tpu.memory_space<vmem>>, vector<1x128x16xf32>
    %179 = vector.shape_cast %178 : vector<1x128x16xf32> to vector<128x16xf32>
    %cst_91 = arith.constant dense<0.000000e+00> : vector<32x16xf32>
    %180 = tpu.matmul %175, %179, %cst_91 {dimension_numbers = #tpu.dot_dimension_numbers<[1], [0], [0], [1], [0, 0, 1, 1], [], []>} : vector<32x128xf32>, vector<128x16xf32>, vector<32x16xf32> -> vector<32x16xf32>
    %181 = tpu.reciprocal %177 {approx = true} : vector<32x1xf32> -> vector<32x1xf32>
    %182 = vector.broadcast %181 : vector<32x1xf32> to vector<32x16xf32>
    %183 = arith.mulf %180, %182 : vector<32x16xf32>
    %cst_92 = arith.constant 2.000000e-01 : f32
    %184 = vector.broadcast %cst_92 : f32 to vector<32x128xf32>
    %185 = arith.mulf %184, %158 : vector<32x128xf32>
    %186 = arith.maximumf %158, %185 : vector<32x128xf32>
    %187 = arith.addf %186, %2 : vector<32x128xf32>
    %cst_93 = arith.constant dense<0xFF800000> : vector<32xf32>
    %188 = vector.multi_reduction <maximumf>, %187, %cst_93 [1] : vector<32x128xf32> to vector<32xf32>
    %189 = vector.shape_cast %188 : vector<32xf32> to vector<32x1xf32>
    %190 = vector.broadcast %189 : vector<32x1xf32> to vector<32x128xf32>
    %191 = arith.subf %187, %190 : vector<32x128xf32>
    %192 = math.exp %191 : vector<32x128xf32>
    %cst_94 = arith.constant dense<0.000000e+00> : vector<32xf32>
    %193 = vector.multi_reduction <add>, %192, %cst_94 [1] : vector<32x128xf32> to vector<32xf32>
    %194 = vector.shape_cast %193 : vector<32xf32> to vector<32x1xf32>
    %c1_95 = arith.constant 1 : index
    %c0_96 = arith.constant 0 : index
    %c0_97 = arith.constant 0 : index
    %195 = vector.load %arg3[%c1_95, %c0_96, %c0_97] : memref<4x128x16xf32, #tpu.memory_space<vmem>>, vector<1x128x16xf32>
    %196 = vector.shape_cast %195 : vector<1x128x16xf32> to vector<128x16xf32>
    %cst_98 = arith.constant dense<0.000000e+00> : vector<32x16xf32>
    %197 = tpu.matmul %192, %196, %cst_98 {dimension_numbers = #tpu.dot_dimension_numbers<[1], [0], [0], [1], [0, 0, 1, 1], [], []>} : vector<32x128xf32>, vector<128x16xf32>, vector<32x16xf32> -> vector<32x16xf32>
    %198 = tpu.reciprocal %194 {approx = true} : vector<32x1xf32> -> vector<32x1xf32>
    %199 = vector.broadcast %198 : vector<32x1xf32> to vector<32x16xf32>
    %200 = arith.mulf %197, %199 : vector<32x16xf32>
    %cst_99 = arith.constant 2.000000e-01 : f32
    %201 = vector.broadcast %cst_99 : f32 to vector<32x128xf32>
    %202 = arith.mulf %201, %162 : vector<32x128xf32>
    %203 = arith.maximumf %162, %202 : vector<32x128xf32>
    %204 = arith.addf %203, %2 : vector<32x128xf32>
    %cst_100 = arith.constant dense<0xFF800000> : vector<32xf32>
    %205 = vector.multi_reduction <maximumf>, %204, %cst_100 [1] : vector<32x128xf32> to vector<32xf32>
    %206 = vector.shape_cast %205 : vector<32xf32> to vector<32x1xf32>
    %207 = vector.broadcast %206 : vector<32x1xf32> to vector<32x128xf32>
    %208 = arith.subf %204, %207 : vector<32x128xf32>
    %209 = math.exp %208 : vector<32x128xf32>
    %cst_101 = arith.constant dense<0.000000e+00> : vector<32xf32>
    %210 = vector.multi_reduction <add>, %209, %cst_101 [1] : vector<32x128xf32> to vector<32xf32>
    %211 = vector.shape_cast %210 : vector<32xf32> to vector<32x1xf32>
    %c2_102 = arith.constant 2 : index
    %c0_103 = arith.constant 0 : index
    %c0_104 = arith.constant 0 : index
    %212 = vector.load %arg3[%c2_102, %c0_103, %c0_104] : memref<4x128x16xf32, #tpu.memory_space<vmem>>, vector<1x128x16xf32>
    %213 = vector.shape_cast %212 : vector<1x128x16xf32> to vector<128x16xf32>
    %cst_105 = arith.constant dense<0.000000e+00> : vector<32x16xf32>
    %214 = tpu.matmul %209, %213, %cst_105 {dimension_numbers = #tpu.dot_dimension_numbers<[1], [0], [0], [1], [0, 0, 1, 1], [], []>} : vector<32x128xf32>, vector<128x16xf32>, vector<32x16xf32> -> vector<32x16xf32>
    %215 = tpu.reciprocal %211 {approx = true} : vector<32x1xf32> -> vector<32x1xf32>
    %216 = vector.broadcast %215 : vector<32x1xf32> to vector<32x16xf32>
    %217 = arith.mulf %214, %216 : vector<32x16xf32>
    %cst_106 = arith.constant 2.000000e-01 : f32
    %218 = vector.broadcast %cst_106 : f32 to vector<32x128xf32>
    %219 = arith.mulf %218, %166 : vector<32x128xf32>
    %220 = arith.maximumf %166, %219 : vector<32x128xf32>
    %221 = arith.addf %220, %2 : vector<32x128xf32>
    %cst_107 = arith.constant dense<0xFF800000> : vector<32xf32>
    %222 = vector.multi_reduction <maximumf>, %221, %cst_107 [1] : vector<32x128xf32> to vector<32xf32>
    %223 = vector.shape_cast %222 : vector<32xf32> to vector<32x1xf32>
    %224 = vector.broadcast %223 : vector<32x1xf32> to vector<32x128xf32>
    %225 = arith.subf %221, %224 : vector<32x128xf32>
    %226 = math.exp %225 : vector<32x128xf32>
    %cst_108 = arith.constant dense<0.000000e+00> : vector<32xf32>
    %227 = vector.multi_reduction <add>, %226, %cst_108 [1] : vector<32x128xf32> to vector<32xf32>
    %228 = vector.shape_cast %227 : vector<32xf32> to vector<32x1xf32>
    %c3_109 = arith.constant 3 : index
    %c0_110 = arith.constant 0 : index
    %c0_111 = arith.constant 0 : index
    %229 = vector.load %arg3[%c3_109, %c0_110, %c0_111] : memref<4x128x16xf32, #tpu.memory_space<vmem>>, vector<1x128x16xf32>
    %230 = vector.shape_cast %229 : vector<1x128x16xf32> to vector<128x16xf32>
    %cst_112 = arith.constant dense<0.000000e+00> : vector<32x16xf32>
    %231 = tpu.matmul %226, %230, %cst_112 {dimension_numbers = #tpu.dot_dimension_numbers<[1], [0], [0], [1], [0, 0, 1, 1], [], []>} : vector<32x128xf32>, vector<128x16xf32>, vector<32x16xf32> -> vector<32x16xf32>
    %232 = tpu.reciprocal %228 {approx = true} : vector<32x1xf32> -> vector<32x1xf32>
    %233 = vector.broadcast %232 : vector<32x1xf32> to vector<32x16xf32>
    %234 = arith.mulf %231, %233 : vector<32x16xf32>
    %cst_113 = arith.constant 0.000000e+00 : f32
    %235 = vector.broadcast %cst_113 : f32 to vector<32x64xf32>
    %236 = tpu.concatenate %183, %200, %217, %234, %235 in 1 : vector<32x16xf32>, vector<32x16xf32>, vector<32x16xf32>, vector<32x16xf32>, vector<32x64xf32> -> vector<32x128xf32>
    %c0_114 = arith.constant 0 : index
    %c0_115 = arith.constant 0 : index
    %237 = vector.load %arg7[%c0_114, %c0_115] : memref<1x128xf32, #tpu.memory_space<vmem>>, vector<1x128xf32>
    %238 = vector.broadcast %237 : vector<1x128xf32> to vector<32x128xf32>
    %239 = arith.addf %236, %238 : vector<32x128xf32>
    %c0_116 = arith.constant 0 : index
    %c0_117 = arith.constant 0 : index
    %240 = vector.load %arg8[%c0_116, %c0_117] : memref<32x128xf32, #tpu.memory_space<vmem>>, vector<32x128xf32>
    tpu.vector_store %arg8[%c0_116, %c0_117], %239 {strides = array<i32>} : memref<32x128xf32, #tpu.memory_space<vmem>>, vector<32x128xf32>,
    return
  }
  func.func @transform_0(%arg0: i32) -> (i32, i32, i32) {
    %c0_i32 = arith.constant 0 : i32
    %c0_i32_0 = arith.constant 0 : i32
    %c0_i32_1 = arith.constant 0 : i32
    return %c0_i32, %arg0, %c0_i32_0 : i32, i32, i32
  }
  func.func @transform_1(%arg0: i32) -> (i32, i32) {
    %c0_i32 = arith.constant 0 : i32
    %c0_i32_0 = arith.constant 0 : i32
    return %arg0, %c0_i32 : i32, i32
  }
  func.func @transform_2(%arg0: i32) -> (i32, i32, i32) {
    %c0_i32 = arith.constant 0 : i32
    %c0_i32_0 = arith.constant 0 : i32
    %c0_i32_1 = arith.constant 0 : i32
    %c0_i32_2 = arith.constant 0 : i32
    return %c0_i32, %c0_i32_0, %c0_i32_1 : i32, i32, i32
  }
  func.func @transform_3(%arg0: i32) -> (i32, i32) {
    %c0_i32 = arith.constant 0 : i32
    %c0_i32_0 = arith.constant 0 : i32
    %c0_i32_1 = arith.constant 0 : i32
    return %c0_i32, %c0_i32_0 : i32, i32
  }
  func.func @transform_4(%arg0: i32) -> (i32, i32) {
    %c0_i32 = arith.constant 0 : i32
    %c0_i32_0 = arith.constant 0 : i32
    return %arg0, %c0_i32 : i32, i32
  }
  func.func @transform_5(%arg0: i32) -> (i32, i32) {
    %c0_i32 = arith.constant 0 : i32
    %c0_i32_0 = arith.constant 0 : i32
    %c0_i32_1 = arith.constant 0 : i32
    return %c0_i32, %c0_i32_0 : i32, i32
  }
  func.func @transform_6(%arg0: i32) -> (i32, i32) {
    %c0_i32 = arith.constant 0 : i32
    %c0_i32_0 = arith.constant 0 : i32
    %c0_i32_1 = arith.constant 0 : i32
    return %c0_i32, %c0_i32_0 : i32, i32
  }
  func.func @transform_7(%arg0: i32) -> (i32, i32) {
    %c0_i32 = arith.constant 0 : i32
    %c0_i32_0 = arith.constant 0 : i32
    return %arg0, %c0_i32 : i32, i32
  }
}

</mosaic_0001>

<llo_original>
// kernel: gat_forward.1
$region0: #{gat_forward.1}
  #allocation0 [shape = 'u32[]', space=smem, size = 0x4, offset = 0x4, fixed_abs, tag = 'smem constant byte address 0x4 - core index']
  #allocation1 [shape = 'u32[144,128]{1,0:T(1,128)}', space=vmem, size = 0x12000, scoped, tag = 'internal scratch']
  %s0 = inlined_call_operand.vmem [shape: f32[8,64,128], index: 0, kind: input, shape index: {}]
  %s1 = inlined_call_operand.vmem [shape: f32[64,128], index: 1, kind: input, shape index: {}]
  %s2 = inlined_call_operand.vmem [shape: f32[4,128,16], index: 2, kind: input, shape index: {}]
  %s3 = inlined_call_operand.vmem [shape: f32[4,128], index: 3, kind: input, shape index: {}]
  %s4 = inlined_call_operand.vmem [shape: f32[64,4], index: 4, kind: input, shape index: {}]
  %s5 = inlined_call_operand.vmem [shape: f32[4,8], index: 5, kind: input, shape index: {}]
  %s6 = inlined_call_operand.vmem [shape: f32[1,128], index: 6, kind: input, shape index: {}]
  %s7 = inlined_call_operand.vmem [shape: f32[64,128], index: 7, kind: output, shape index: {}]
  %s8 = sld [smem:[#allocation0]]
  $region103: #{gat_forward.1} parent=0
    _
  %s10 = ssub.s32 1, %s8
  %s11 = scalar_select 0, %s10, %s8
  $region1: #{gat_forward.1} parent=0
    #allocation2 [shape = 'u8[262144]{0}', space=vmem, size = 0x40000, scoped, tag = 'input window, operand 0']
    #allocation3 [shape = 'u8[2048]{0}', space=smem, size = 0x800, scoped, tag = 'input window, operand 5, single buffered']
    #allocation4 [shape = 's32[2]{0}', space=sflag, size = 0x8, scoped, tag = 'scoped memory for gat_forward.1']
    %12 = vsyncpa [#allocation4], 0
    loop: start=0, step=1, limit=4
    $region2: #{gat_forward.1} parent=1 // loop_pre_header
      _
    $region3: #{gat_forward.1} parent=1 // loop_header
      %s14 = sphi 0, %s18
      %p15 = scmp.ge.s32.totalorder %s14, 4
      %s24 = sphi 0, %s26
      %s27 = sphi 0, %s24
      %s28 = sphi 0, %s27
      %s44 = sphi 0, %s28
      %s50 = sphi 0, %s52
      %s53 = sphi 0, %s50
      %s54 = sphi 0, %s53
      %s70 = sphi 0, %s54
      %s74 = sphi 0, %s74
      %s76 = sphi 0, %s74
      %s77 = sphi 0, %s76
      %s91 = sphi 0, %s77
      %s95 = sphi 0, %s95
      %s97 = sphi 0, %s95
      %s98 = sphi 0, %s97
      %s112 = sphi 0, %s98
      %s118 = sphi 0, %s120
      %s121 = sphi 0, %s118
      %s122 = sphi 0, %s121
      %s138 = sphi 0, %s122
      %s142 = sphi 0, %s142
      %s144 = sphi 0, %s142
      %s145 = sphi 0, %s144
      %s159 = sphi 0, %s145
      %s163 = sphi 0, %s163
      %s165 = sphi 0, %s163
      %s166 = sphi 0, %s165
      %s180 = sphi 0, %s166
      %s186 = sphi 0, %s188
      %s189 = sphi 0, %s186
      %s190 = sphi 0, %s189
      %s206 = sphi 0, %s190
    $region4: #{gat_forward.1} parent=1 // loop_header_branch
      %17 = sbr.rel (%p15) target = $region8
    $region5: #{gat_forward.1} parent=1 // loop_body
      %s19 = ssub.s32 %s14, 1
      %s20 = ssub.s32 %s14, 2
      %s21 = sadd.s32 %s14, 1
      %s22 = ssub.s32 %s14, %s21
      %p23 = scmp.eq.s32.totalorder %s22, 0
      %s25 = sadd.s32 %s24, 1
      %s26 = scalar_select %p23, %s24, %s25
      %p29 = pneg %p23
      %p30 = scmp.eq.s32.totalorder %s14, 1
      %p31 = por %p29, %p30
      %p32 = scmp.ne.s32.totalorder %s24, %s27
      %p33 = scmp.eq.s32.totalorder %s14, 0
      %p34 = por %p32, %p33
      %p35 = scmp.ne.s32.totalorder %s24, %s27
      %p36 = scmp.eq.s32.totalorder %s19, 1
      %p37 = por %p35, %p36
      %p38 = scmp.ne.s32.totalorder %s27, %s28
      %p39 = scmp.eq.s32.totalorder %s19, 0
      %p40 = por %p38, %p39
      %p41 = scmp.ne.s32.totalorder %s27, %s28
      %p42 = scmp.eq.s32.totalorder %s20, 1
      %p43 = por %p41, %p42
      %p45 = scmp.ne.s32.totalorder %s28, %s44
      %p46 = scmp.eq.s32.totalorder %s20, 0
      %p47 = por %p45, %p46
      %s48 = ssub.s32 %s14, %s21
      %p49 = scmp.eq.s32.totalorder %s48, 0
      %s51 = sadd.s32 %s50, 1
      %s52 = scalar_select %p49, %s50, %s51
      %p55 = pneg %p49
      %p56 = scmp.eq.s32.totalorder %s14, 1
      %p57 = por %p55, %p56
      %p58 = scmp.ne.s32.totalorder %s50, %s53
      %p59 = scmp.eq.s32.totalorder %s14, 0
      %p60 = por %p58, %p59
      %p61 = scmp.ne.s32.totalorder %s50, %s53
      %p62 = scmp.eq.s32.totalorder %s19, 1
      %p63 = por %p61, %p62
      %p64 = scmp.ne.s32.totalorder %s53, %s54
      %p65 = scmp.eq.s32.totalorder %s19, 0
      %p66 = por %p64, %p65
      %p67 = scmp.ne.s32.totalorder %s53, %s54
      %p68 = scmp.eq.s32.totalorder %s20, 1
      %p69 = por %p67, %p68
      %p71 = scmp.ne.s32.totalorder %s54, %s70
      %p72 = scmp.eq.s32.totalorder %s20, 0
      %p73 = por %p71, %p72
      %s75 = sadd.s32 %s74, 1
      %p78 = scmp.eq.s32.totalorder %s14, 1
      %p79 = scmp.ne.s32.totalorder %s74, %s76
      %p80 = scmp.eq.s32.totalorder %s14, 0
      %p81 = por %p79, %p80
      %p82 = scmp.ne.s32.totalorder %s74, %s76
      %p83 = scmp.eq.s32.totalorder %s19, 1
      %p84 = por %p82, %p83
      %p85 = scmp.ne.s32.totalorder %s76, %s77
      %p86 = scmp.eq.s32.totalorder %s19, 0
      %p87 = por %p85, %p86
      %p88 = scmp.ne.s32.totalorder %s76, %s77
      %p89 = scmp.eq.s32.totalorder %s20, 1
      %p90 = por %p88, %p89
      %p92 = scmp.ne.s32.totalorder %s77, %s91
      %p93 = scmp.eq.s32.totalorder %s20, 0
      %p94 = por %p92, %p93
      %s96 = sadd.s32 %s95, 1
      %p99 = scmp.eq.s32.totalorder %s14, 1
      %p100 = scmp.ne.s32.totalorder %s95, %s97
      %p101 = scmp.eq.s32.totalorder %s14, 0
      %p102 = por %p100, %p101
      %p103 = scmp.ne.s32.totalorder %s95, %s97
      %p104 = scmp.eq.s32.totalorder %s19, 1
      %p105 = por %p103, %p104
      %p106 = scmp.ne.s32.totalorder %s97, %s98
      %p107 = scmp.eq.s32.totalorder %s19, 0
      %p108 = por %p106, %p107
      %p109 = scmp.ne.s32.totalorder %s97, %s98
      %p110 = scmp.eq.s32.totalorder %s20, 1
      %p111 = por %p109, %p110
      %p113 = scmp.ne.s32.totalorder %s98, %s112
      %p114 = scmp.eq.s32.totalorder %s20, 0
      %p115 = por %p113, %p114
      %s116 = ssub.s32 %s14, %s21
      %p117 = scmp.eq.s32.totalorder %s116, 0
      %s119 = sadd.s32 %s118, 1
      %s120 = scalar_select %p117, %s118, %s119
      %p123 = pneg %p117
      %p124 = scmp.eq.s32.totalorder %s14, 1
      %p125 = por %p123, %p124
      %p126 = scmp.ne.s32.totalorder %s118, %s121
      %p127 = scmp.eq.s32.totalorder %s14, 0
      %p128 = por %p126, %p127
      %p129 = scmp.ne.s32.totalorder %s118, %s121
      %p130 = scmp.eq.s32.totalorder %s19, 1
      %p131 = por %p129, %p130
      %p132 = scmp.ne.s32.totalorder %s121, %s122
      %p133 = scmp.eq.s32.totalorder %s19, 0
      %p134 = por %p132, %p133
      %p135 = scmp.ne.s32.totalorder %s121, %s122
      %p136 = scmp.eq.s32.totalorder %s20, 1
      %p137 = por %p135, %p136
      %p139 = scmp.ne.s32.totalorder %s122, %s138
      %p140 = scmp.eq.s32.totalorder %s20, 0
      %p141 = por %p139, %p140
      %s143 = sadd.s32 %s142, 1
      %p146 = scmp.eq.s32.totalorder %s14, 1
      %p147 = scmp.ne.s32.totalorder %s142, %s144
      %p148 = scmp.eq.s32.totalorder %s14, 0
      %p149 = por %p147, %p148
      %p150 = scmp.ne.s32.totalorder %s142, %s144
      %p151 = scmp.eq.s32.totalorder %s19, 1
      %p152 = por %p150, %p151
      %p153 = scmp.ne.s32.totalorder %s144, %s145
      %p154 = scmp.eq.s32.totalorder %s19, 0
      %p155 = por %p153, %p154
      %p156 = scmp.ne.s32.totalorder %s144, %s145
      %p157 = scmp.eq.s32.totalorder %s20, 1
      %p158 = por %p156, %p157
      %p160 = scmp.ne.s32.totalorder %s145, %s159
      %p161 = scmp.eq.s32.totalorder %s20, 0
      %p162 = por %p160, %p161
      %s164 = sadd.s32 %s163, 1
      %p167 = scmp.eq.s32.totalorder %s14, 1
      %p168 = scmp.ne.s32.totalorder %s163, %s165
      %p169 = scmp.eq.s32.totalorder %s14, 0
      %p170 = por %p168, %p169
      %p171 = scmp.ne.s32.totalorder %s163, %s165
      %p172 = scmp.eq.s32.totalorder %s19, 1
      %p173 = por %p171, %p172
      %p174 = scmp.ne.s32.totalorder %s165, %s166
      %p175 = scmp.eq.s32.totalorder %s19, 0
      %p176 = por %p174, %p175
      %p177 = scmp.ne.s32.totalorder %s165, %s166
      %p178 = scmp.eq.s32.totalorder %s20, 1
      %p179 = por %p177, %p178
      %p181 = scmp.ne.s32.totalorder %s166, %s180
      %p182 = scmp.eq.s32.totalorder %s20, 0
      %p183 = por %p181, %p182
      %s184 = ssub.s32 %s14, %s21
      %p185 = scmp.eq.s32.totalorder %s184, 0
      %s187 = sadd.s32 %s186, 1
      %s188 = scalar_select %p185, %s186, %s187
      %p191 = pneg %p185
      %p192 = scmp.eq.s32.totalorder %s14, 1
      %p193 = por %p191, %p192
      %p194 = scmp.ne.s32.totalorder %s186, %s189
      %p195 = scmp.eq.s32.totalorder %s14, 0
      %p196 = por %p194, %p195
      %p197 = scmp.ne.s32.totalorder %s186, %s189
      %p198 = scmp.eq.s32.totalorder %s19, 1
      %p199 = por %p197, %p198
      %p200 = scmp.ne.s32.totalorder %s189, %s190
      %p201 = scmp.eq.s32.totalorder %s19, 0
      %p202 = por %p200, %p201
      %p203 = scmp.ne.s32.totalorder %s189, %s190
      %p204 = scmp.eq.s32.totalorder %s20, 1
      %p205 = por %p203, %p204
      %p207 = scmp.ne.s32.totalorder %s190, %s206
      %p208 = scmp.eq.s32.totalorder %s20, 0
      %p209 = por %p207, %p208
      %p210 = scmp.le.s32.totalorder 1, %s14
      %p211 = scmp.lt.s32.totalorder %s14, 3
      %p212 = pnand %p210, %p211
      %p213 = pneg %p212
      // Predicated region
      $region9: #{gat_forward.1} parent=5 // pred_check
        _
      $region10: #{gat_forward.1} parent=5 // pred_check_branch
        %215 = sbr.rel (%p212) target = $region12
      $region11: #{gat_forward.1} parent=5 // pred_region
        %s216 = ssub.s32 %s14, 1
        // Predicated region
        $region13: #{gat_forward.1} parent=11 // pred_check
          %p217 = pneg %p87
        $region14: #{gat_forward.1} parent=11 // pred_check_branch
          %219 = sbr.rel (%p217) target = $region16
        $region15: #{gat_forward.1} parent=11 // pred_region
          _
        $region16: #{gat_forward.1} parent=11 // pred_fallthru
          _
        // Predicated region
        $region17: #{gat_forward.1} parent=11 // pred_check
          %p220 = pneg %p108
        $region18: #{gat_forward.1} parent=11 // pred_check_branch
          %222 = sbr.rel (%p220) target = $region20
        $region19: #{gat_forward.1} parent=11 // pred_region
          _
        $region20: #{gat_forward.1} parent=11 // pred_fallthru
          _
        // Predicated region
        $region21: #{gat_forward.1} parent=11 // pred_check
          %p223 = pneg %p155
        $region22: #{gat_forward.1} parent=11 // pred_check_branch
          %225 = sbr.rel (%p223) target = $region24
        $region23: #{gat_forward.1} parent=11 // pred_region
          %s227 = ssub.s32 64, 64
          %228 = vsyncadd [#allocation4], %s227
          %s230 = sshll.u32 %s5, 4
          %s231 = int_to_ptr.vmem [resolvable:$true] %s230
          %233 = dma.vmem_to_smem %s231, 64, [#allocation3], [#allocation4]
        $region24: #{gat_forward.1} parent=11 // pred_fallthru
          _
        // Predicated region
        $region25: #{gat_forward.1} parent=11 // pred_check
          %p234 = pneg %p176
        $region26: #{gat_forward.1} parent=11 // pred_check_branch
          %236 = sbr.rel (%p234) target = $region28
        $region27: #{gat_forward.1} parent=11 // pred_region
          _
        $region28: #{gat_forward.1} parent=11 // pred_fallthru
          _
      $region12: #{gat_forward.1} parent=5 // pred_fallthru
        _
      %p237 = scmp.lt.s32.totalorder %s14, 2
      // Predicated region
      $region29: #{gat_forward.1} parent=5 // pred_check
        %p238 = pneg %p237
      $region30: #{gat_forward.1} parent=5 // pred_check_branch
        %240 = sbr.rel (%p238) target = $region32
      $region31: #{gat_forward.1} parent=5 // pred_region
        // Predicated region
        $region33: #{gat_forward.1} parent=31 // pred_check
          %p241 = pneg %p34
        $region34: #{gat_forward.1} parent=31 // pred_check_branch
          %243 = sbr.rel (%p241) target = $region36
        $region35: #{gat_forward.1} parent=31 // pred_region
          %s244 = sand.u32 %s24, 1
          %s245 = sand.u32 %s24, 1
          %s246 = smul.addr %s245, 256
          %s247 = scalar_lea.vmem [#allocation2], %s246
          %s248 = smul.u32 4, %s14
          %s249 = smul.addr %s248, 8
          %s250 = scalar_lea.vmem %s0, %s249
          // Predicated region
          $region37: #{gat_forward.1} parent=35 // pred_check
            _
          $region38: #{gat_forward.1} parent=35 // pred_check_branch
            %252 = sbr.rel (0) target = $region40
          $region39: #{gat_forward.1} parent=35 // pred_region
            // Predicated region
            $region41: #{gat_forward.1} parent=39 // pred_check
              _
            $region42: #{gat_forward.1} parent=39 // pred_check_branch
              %254 = sbr.rel (0) target = $region44
            $region43: #{gat_forward.1} parent=39 // pred_region
              // Predicated region
              $region56: #{gat_forward.1} parent=43 // pred_check
                _
              $region57: #{gat_forward.1} parent=43 // pred_check_branch
                %331 = sbr.rel (0) target = $region59
              $region58: #{gat_forward.1} parent=43 // pred_region
                loop: start=0, step=1, limit=1
                $region60: #{gat_forward.1} parent=58 // loop_pre_header
                  _
                $region61: #{gat_forward.1} parent=58 // loop_header
                  %s333 = sphi 0, %s337
                  %p334 = scmp.ge.s32.totalorder %s333, 1
                  %s338 = sphi %s250, %s250
                  %s339 = sphi %s247, %s247
                $region62: #{gat_forward.1} parent=58 // loop_header_branch
                  %336 = sbr.rel (%p334) target = $region66
                $region63: #{gat_forward.1} parent=58 // loop_body
                  %v340 = vld [vmem:[%s338] sm:$0xff]
                  %341 = vst [vmem:[%s339] sm:$0xff] %v340
                  %v342 = vld [vmem:[%s338 + $0x8] sm:$0xff]
                  %343 = vst [vmem:[%s339 + $0x8] sm:$0xff] %v342
                  %v344 = vld [vmem:[%s338 + $0x10] sm:$0xff]
                  %345 = vst [vmem:[%s339 + $0x10] sm:$0xff] %v344
                  %v346 = vld [vmem:[%s338 + $0x18] sm:$0xff]
                  %347 = vst [vmem:[%s339 + $0x18] sm:$0xff] %v346
                  %v348 = vld [vmem:[%s338 + $0x40] sm:$0xff]
                  %349 = vst [vmem:[%s339 + $0x20] sm:$0xff] %v348
                  %v350 = vld [vmem:[%s338 + $0x48] sm:$0xff]
                  %351 = vst [vmem:[%s339 + $0x28] sm:$0xff] %v350
                  %v352 = vld [vmem:[%s338 + $0x50] sm:$0xff]
                  %353 = vst [vmem:[%s339 + $0x30] sm:$0xff] %v352
                  %v354 = vld [vmem:[%s338 + $0x58] sm:$0xff]
                  %355 = vst [vmem:[%s339 + $0x38] sm:$0xff] %v354
                  %v356 = vld [vmem:[%s338 + $0x80] sm:$0xff]
                  %357 = vst [vmem:[%s339 + $0x40] sm:$0xff] %v356
                  %v358 = vld [vmem:[%s338 + $0x88] sm:$0xff]
                  %359 = vst [vmem:[%s339 + $0x48] sm:$0xff] %v358
                  %v360 = vld [vmem:[%s338 + $0x90] sm:$0xff]
                  %361 = vst [vmem:[%s339 + $0x50] sm:$0xff] %v360
                  %v362 = vld [vmem:[%s338 + $0x98] sm:$0xff]
                  %363 = vst [vmem:[%s339 + $0x58] sm:$0xff] %v362
                  %v364 = vld [vmem:[%s338 + $0xc0] sm:$0xff]
                  %365 = vst [vmem:[%s339 + $0x60] sm:$0xff] %v364
                  %v366 = vld [vmem:[%s338 + $0xc8] sm:$0xff]
                  %367 = vst [vmem:[%s339 + $0x68] sm:$0xff] %v366
                  %v368 = vld [vmem:[%s338 + $0xd0] sm:$0xff]
                  %369 = vst [vmem:[%s339 + $0x70] sm:$0xff] %v368
                  %v370 = vld [vmem:[%s338 + $0xd8] sm:$0xff]
                  %371 = vst [vmem:[%s339 + $0x78] sm:$0xff] %v370
                  %v372 = vld [vmem:[%s338 + $0x100] sm:$0xff]
                  %373 = vst [vmem:[%s339 + $0x80] sm:$0xff] %v372
                  %v374 = vld [vmem:[%s338 + $0x108] sm:$0xff]
                  %375 = vst [vmem:[%s339 + $0x88] sm:$0xff] %v374
                  %v376 = vld [vmem:[%s338 + $0x110] sm:$0xff]
                  %377 = vst [vmem:[%s339 + $0x90] sm:$0xff] %v376
                  %v378 = vld [vmem:[%s338 + $0x118] sm:$0xff]
                  %379 = vst [vmem:[%s339 + $0x98] sm:$0xff] %v378
                  %v380 = vld [vmem:[%s338 + $0x140] sm:$0xff]
                  %381 = vst [vmem:[%s339 + $0xa0] sm:$0xff] %v380
                  %v382 = vld [vmem:[%s338 + $0x148] sm:$0xff]
                  %383 = vst [vmem:[%s339 + $0xa8] sm:$0xff] %v382
                  %v384 = vld [vmem:[%s338 + $0x150] sm:$0xff]
                  %385 = vst [vmem:[%s339 + $0xb0] sm:$0xff] %v384
                  %v386 = vld [vmem:[%s338 + $0x158] sm:$0xff]
                  %387 = vst [vmem:[%s339 + $0xb8] sm:$0xff] %v386
                  %v388 = vld [vmem:[%s338 + $0x180] sm:$0xff]
                  %389 = vst [vmem:[%s339 + $0xc0] sm:$0xff] %v388
                  %v390 = vld [vmem:[%s338 + $0x188] sm:$0xff]
                  %391 = vst [vmem:[%s339 + $0xc8] sm:$0xff] %v390
                  %v392 = vld [vmem:[%s338 + $0x190] sm:$0xff]
                  %393 = vst [vmem:[%s339 + $0xd0] sm:$0xff] %v392
                  %v394 = vld [vmem:[%s338 + $0x198] sm:$0xff]
                  %395 = vst [vmem:[%s339 + $0xd8] sm:$0xff] %v394
                  %v396 = vld [vmem:[%s338 + $0x1c0] sm:$0xff]
                  %397 = vst [vmem:[%s339 + $0xe0] sm:$0xff] %v396
                  %v398 = vld [vmem:[%s338 + $0x1c8] sm:$0xff]
                  %399 = vst [vmem:[%s339 + $0xe8] sm:$0xff] %v398
                  %v400 = vld [vmem:[%s338 + $0x1d0] sm:$0xff]
                  %401 = vst [vmem:[%s339 + $0xf0] sm:$0xff] %v400
                  %v402 = vld [vmem:[%s338 + $0x1d8] sm:$0xff]
                  %403 = vst [vmem:[%s339 + $0xf8] sm:$0xff] %v402
                $region64: #{gat_forward.1} parent=58 // loop_footer
                  %s337 = sadd.s32 1, %s333
                $region65: #{gat_forward.1} parent=58 // loop_footer_branch
                  %332 = sbr.rel target = $region61
                $region66: #{gat_forward.1} parent=58 // loop_exit
                  _
              $region59: #{gat_forward.1} parent=43 // pred_fallthru
                _
              // Predicated region
              $region67: #{gat_forward.1} parent=43 // pred_check
                _
              $region68: #{gat_forward.1} parent=43 // pred_check_branch
                %405 = sbr.rel target = $region70
              $region69: #{gat_forward.1} parent=43 // pred_region
                _
              $region70: #{gat_forward.1} parent=43 // pred_fallthru
                _
            $region44: #{gat_forward.1} parent=39 // pred_fallthru
              _
            // Predicated region
            $region45: #{gat_forward.1} parent=39 // pred_check
              _
            $region46: #{gat_forward.1} parent=39 // pred_check_branch
              %256 = sbr.rel target = $region48
            $region47: #{gat_forward.1} parent=39 // pred_region
              loop: start=0, step=1, limit=1
              $region49: #{gat_forward.1} parent=47 // loop_pre_header
                _
              $region50: #{gat_forward.1} parent=47 // loop_header
                %s259 = sphi 0, %s263
                %p260 = scmp.ge.s32.totalorder %s259, 1
                %s264 = sphi %s250, %s250
                %s265 = sphi %s247, %s247
              $region51: #{gat_forward.1} parent=47 // loop_header_branch
                %262 = sbr.rel (%p260) target = $region55
              $region52: #{gat_forward.1} parent=47 // loop_body
                %v266 = vld [vmem:[%s264] sm:$0xff]
                %267 = vst [vmem:[%s265] sm:$0xff] %v266
                %v268 = vld [vmem:[%s264 + $0x8] sm:$0xff]
                %269 = vst [vmem:[%s265 + $0x8] sm:$0xff] %v268
                %v270 = vld [vmem:[%s264 + $0x10] sm:$0xff]
                %271 = vst [vmem:[%s265 + $0x10] sm:$0xff] %v270
                %v272 = vld [vmem:[%s264 + $0x18] sm:$0xff]
                %273 = vst [vmem:[%s265 + $0x18] sm:$0xff] %v272
                %v274 = vld [vmem:[%s264 + $0x40] sm:$0xff]
                %275 = vst [vmem:[%s265 + $0x20] sm:$0xff] %v274
                %v276 = vld [vmem:[%s264 + $0x48] sm:$0xff]
                %277 = vst [vmem:[%s265 + $0x28] sm:$0xff] %v276
                %v278 = vld [vmem:[%s264 + $0x50] sm:$0xff]
                %279 = vst [vmem:[%s265 + $0x30] sm:$0xff] %v278
                %v280 = vld [vmem:[%s264 + $0x58] sm:$0xff]
                %281 = vst [vmem:[%s265 + $0x38] sm:$0xff] %v280
                %v282 = vld [vmem:[%s264 + $0x80] sm:$0xff]
                %283 = vst [vmem:[%s265 + $0x40] sm:$0xff] %v282
                %v284 = vld [vmem:[%s264 + $0x88] sm:$0xff]
                %285 = vst [vmem:[%s265 + $0x48] sm:$0xff] %v284
                %v286 = vld [vmem:[%s264 + $0x90] sm:$0xff]
                %287 = vst [vmem:[%s265 + $0x50] sm:$0xff] %v286
                %v288 = vld [vmem:[%s264 + $0x98] sm:$0xff]
                %289 = vst [vmem:[%s265 + $0x58] sm:$0xff] %v288
                %v290 = vld [vmem:[%s264 + $0xc0] sm:$0xff]
                %291 = vst [vmem:[%s265 + $0x60] sm:$0xff] %v290
                %v292 = vld [vmem:[%s264 + $0xc8] sm:$0xff]
                %293 = vst [vmem:[%s265 + $0x68] sm:$0xff] %v292
                %v294 = vld [vmem:[%s264 + $0xd0] sm:$0xff]
                %295 = vst [vmem:[%s265 + $0x70] sm:$0xff] %v294
                %v296 = vld [vmem:[%s264 + $0xd8] sm:$0xff]
                %297 = vst [vmem:[%s265 + $0x78] sm:$0xff] %v296
                %v298 = vld [vmem:[%s264 + $0x100] sm:$0xff]
                %299 = vst [vmem:[%s265 + $0x80] sm:$0xff] %v298
                %v300 = vld [vmem:[%s264 + $0x108] sm:$0xff]
                %301 = vst [vmem:[%s265 + $0x88] sm:$0xff] %v300
                %v302 = vld [vmem:[%s264 + $0x110] sm:$0xff]
                %303 = vst [vmem:[%s265 + $0x90] sm:$0xff] %v302
                %v304 = vld [vmem:[%s264 + $0x118] sm:$0xff]
                %305 = vst [vmem:[%s265 + $0x98] sm:$0xff] %v304
                %v306 = vld [vmem:[%s264 + $0x140] sm:$0xff]
                %307 = vst [vmem:[%s265 + $0xa0] sm:$0xff] %v306
                %v308 = vld [vmem:[%s264 + $0x148] sm:$0xff]
                %309 = vst [vmem:[%s265 + $0xa8] sm:$0xff] %v308
                %v310 = vld [vmem:[%s264 + $0x150] sm:$0xff]
                %311 = vst [vmem:[%s265 + $0xb0] sm:$0xff] %v310
                %v312 = vld [vmem:[%s264 + $0x158] sm:$0xff]
                %313 = vst [vmem:[%s265 + $0xb8] sm:$0xff] %v312
                %v314 = vld [vmem:[%s264 + $0x180] sm:$0xff]
                %315 = vst [vmem:[%s265 + $0xc0] sm:$0xff] %v314
                %v316 = vld [vmem:[%s264 + $0x188] sm:$0xff]
                %317 = vst [vmem:[%s265 + $0xc8] sm:$0xff] %v316
                %v318 = vld [vmem:[%s264 + $0x190] sm:$0xff]
                %319 = vst [vmem:[%s265 + $0xd0] sm:$0xff] %v318
                %v320 = vld [vmem:[%s264 + $0x198] sm:$0xff]
                %321 = vst [vmem:[%s265 + $0xd8] sm:$0xff] %v320
                %v322 = vld [vmem:[%s264 + $0x1c0] sm:$0xff]
                %323 = vst [vmem:[%s265 + $0xe0] sm:$0xff] %v322
                %v324 = vld [vmem:[%s264 + $0x1c8] sm:$0xff]
                %325 = vst [vmem:[%s265 + $0xe8] sm:$0xff] %v324
                %v326 = vld [vmem:[%s264 + $0x1d0] sm:$0xff]
                %327 = vst [vmem:[%s265 + $0xf0] sm:$0xff] %v326
                %v328 = vld [vmem:[%s264 + $0x1d8] sm:$0xff]
                %329 = vst [vmem:[%s265 + $0xf8] sm:$0xff] %v328
              $region53: #{gat_forward.1} parent=47 // loop_footer
                %s263 = sadd.s32 1, %s259
              $region54: #{gat_forward.1} parent=47 // loop_footer_branch
                %258 = sbr.rel target = $region50
              $region55: #{gat_forward.1} parent=47 // loop_exit
                _
            $region48: #{gat_forward.1} parent=39 // pred_fallthru
              _
          $region40: #{gat_forward.1} parent=35 // pred_fallthru
            _
          %406 = vnop
        $region36: #{gat_forward.1} parent=31 // pred_fallthru
          _
        // Predicated region
        $region71: #{gat_forward.1} parent=31 // pred_check
          %p407 = pneg %p60
        $region72: #{gat_forward.1} parent=31 // pred_check_branch
          %409 = sbr.rel (%p407) target = $region74
        $region73: #{gat_forward.1} parent=31 // pred_region
          %s410 = smul.u32 4, %s14
          %p411 = scmp.lt.s32.totalorder %s410, 7
          %s412 = scalar_select %p411, %s410, 7
          %s413 = smul.addr %s412, 8
          %s414 = scalar_lea.vmem %s1, %s413
          %s415 = smul.u32 4, %s14
        $region74: #{gat_forward.1} parent=31 // pred_fallthru
          _
        // Predicated region
        $region75: #{gat_forward.1} parent=31 // pred_check
          %p416 = pneg %p128
        $region76: #{gat_forward.1} parent=31 // pred_check_branch
          %418 = sbr.rel (%p416) target = $region78
        $region77: #{gat_forward.1} parent=31 // pred_region
          %s419 = smul.u32 4, %s14
          %p420 = scmp.lt.s32.totalorder %s419, 7
          %s421 = scalar_select %p420, %s419, 7
          %s422 = smul.addr %s421, 8
          %s423 = scalar_lea.vmem %s4, %s422
          %s424 = smul.u32 4, %s14
        $region78: #{gat_forward.1} parent=31 // pred_fallthru
          _
      $region32: #{gat_forward.1} parent=5 // pred_fallthru
        _
      %p425 = scmp.le.s32.totalorder 1, %s14
      %p426 = scmp.lt.s32.totalorder %s14, 3
      %p427 = pnand %p425, %p426
      %p428 = pneg %p427
      // Predicated region
      $region79: #{gat_forward.1} parent=5 // pred_check
        _
      $region80: #{gat_forward.1} parent=5 // pred_check_branch
        %430 = sbr.rel (%p427) target = $region82
      $region81: #{gat_forward.1} parent=5 // pred_region
        %s431 = ssub.s32 %s14, 1
        %s432 = sand.u32 %s27, 1
        %s433 = sand.u32 %s27, 1
        %s434 = smul.addr %s433, 256
        %s435 = scalar_lea.vmem [#allocation2], %s434
        // Predicated region
        $region83: #{gat_forward.1} parent=81 // pred_check
          %p436 = pneg %p40
        $region84: #{gat_forward.1} parent=81 // pred_check_branch
          %438 = sbr.rel (%p436) target = $region86
        $region85: #{gat_forward.1} parent=81 // pred_region
          _
        $region86: #{gat_forward.1} parent=81 // pred_fallthru
          _
        // Predicated region
        $region87: #{gat_forward.1} parent=81 // pred_check
          %p439 = pneg %p155
        $region88: #{gat_forward.1} parent=81 // pred_check_branch
          %441 = sbr.rel (%p439) target = $region90
        $region89: #{gat_forward.1} parent=81 // pred_region
          %442 = dma.done [#allocation4], 64
        $region90: #{gat_forward.1} parent=81 // pred_fallthru
          _
        %443 = sfence
        %s444 = sand.u32 %s27, 1
        %s445 = sand.u32 %s27, 1
        %s446 = smul.addr %s445, 256
        %s447 = scalar_lea.vmem [#allocation2], %s446
        %p448 = pneg %p40
        %p449 = pneg %p37
        %s450 = smul.u32 4, %s19
        %p451 = scmp.lt.s32.totalorder %s450, 7
        %s452 = scalar_select %p451, %s450, 7
        %s453 = smul.addr %s452, 8
        %s454 = scalar_lea.vmem %s1, %s453
        %p455 = pneg %p66
        %p456 = pneg %p63
        %p457 = pneg %p87
        %p458 = pneg %p84
        %p459 = pneg %p108
        %p460 = pneg %p105
        %s461 = smul.u32 4, %s19
        %p462 = scmp.lt.s32.totalorder %s461, 7
        %s463 = scalar_select %p462, %s461, 7
        %s464 = smul.addr %s463, 8
        %s465 = scalar_lea.vmem %s4, %s464
        %p466 = pneg %p134
        %p467 = pneg %p131
        %p468 = pneg %p155
        %p469 = pneg %p152
        %p470 = pneg %p176
        %p471 = pneg %p173
        %p472 = pneg %p202
        %p473 = pneg %p199
        %s474 = smul.u32 4, %s19
        %p475 = scmp.lt.s32.totalorder %s474, 7
        %s476 = scalar_select %p475, %s474, 7
        %s477 = smul.addr %s476, 8
        %s478 = scalar_lea.vmem %s7, %s477
        %s479 = smul.u32 4, %s19
        %s480 = smul.u32 4, %s19
        %p481 = scmp.lt.s32.totalorder %s480, 7
        %s482 = scalar_select %p481, %s480, 7
        %s483 = smul.addr %s482, 8
        %s484 = scalar_lea.vmem %s1, %s483
        %s485 = smul.u32 4, %s19
        %s486 = smul.u32 4, %s19
        %p487 = scmp.lt.s32.totalorder %s486, 7
        %s488 = scalar_select %p487, %s486, 7
        %s489 = smul.addr %s488, 8
        %s490 = scalar_lea.vmem %s4, %s489
        %s491 = smul.u32 4, %s19
        %s492 = smul.u32 4, %s19
        %p493 = scmp.lt.s32.totalorder %s492, 7
        %s494 = scalar_select %p493, %s492, 7
        %s495 = smul.addr %s494, 8
        %s496 = scalar_lea.vmem %s7, %s495
        %s497 = smul.u32 4, %s19
        %v498 = vld [vmem:[%s490] sm:$0xff]
        %v499 = vld [vmem:[%s490 + $0x8] sm:$0xff]
        %v500 = vld [vmem:[%s490 + $0x10] sm:$0xff]
        %v501 = vld [vmem:[%s490 + $0x18] sm:$0xff]
        %v502 = vld [vmem:[%s3] sm:$0xf]
        %v503 = vld [vmem:[%s484] sm:$0xff]
        %v504 = vld [vmem:[%s484 + $0x8] sm:$0xff]
        %v505 = vld [vmem:[%s484 + $0x10] sm:$0xff]
        %v506 = vld [vmem:[%s484 + $0x18] sm:$0xff]
        %508 = vset.pattern.permute.xlu0 0
        %509 = vperm.xlu0 %508, %v498
        %v510 = vpop.permute.xlu0 %509
        %513 = vset.pattern.permute.xlu0 0
        %514 = vperm.xlu0 %513, %v499
        %v515 = vpop.permute.xlu0 %514
        %518 = vset.pattern.permute.xlu0 0
        %519 = vperm.xlu0 %518, %v500
        %v520 = vpop.permute.xlu0 %519
        %523 = vset.pattern.permute.xlu0 0
        %524 = vperm.xlu0 %523, %v501
        %v525 = vpop.permute.xlu0 %524
        %v527 = vlaneseq
        %v528 = vshrl.u32 %v527, 7
        %v529 = vsub.s32 0, %v528
        %v530 = vrot.slane %v502, %v529
        %v531 = vadd.f32 %v510, %v530
        %v532 = vadd.f32 %v515, %v530
        %v533 = vadd.f32 %v520, %v530
        %v534 = vadd.f32 %v525, %v530
        %535 = vset.pattern.permute.xlu0 1
        %536 = vperm.xlu0 %535, %v498
        %v537 = vpop.permute.xlu0 %536
        %539 = vset.pattern.permute.xlu0 1
        %540 = vperm.xlu0 %539, %v499
        %v541 = vpop.permute.xlu0 %540
        %543 = vset.pattern.permute.xlu0 1
        %544 = vperm.xlu0 %543, %v500
        %v545 = vpop.permute.xlu0 %544
        %547 = vset.pattern.permute.xlu0 1
        %548 = vperm.xlu0 %547, %v501
        %v549 = vpop.permute.xlu0 %548
        %v551 = vlaneseq
        %v552 = vshrl.u32 %v551, 7
        %v553 = vsub.s32 1, %v552
        %v554 = vrot.slane %v502, %v553
        %v555 = vadd.f32 %v537, %v554
        %v556 = vadd.f32 %v541, %v554
        %v557 = vadd.f32 %v545, %v554
        %v558 = vadd.f32 %v549, %v554
        %559 = vset.pattern.permute.xlu0 2
        %560 = vperm.xlu0 %559, %v498
        %v561 = vpop.permute.xlu0 %560
        %563 = vset.pattern.permute.xlu0 2
        %564 = vperm.xlu0 %563, %v499
        %v565 = vpop.permute.xlu0 %564
        %567 = vset.pattern.permute.xlu0 2
        %568 = vperm.xlu0 %567, %v500
        %v569 = vpop.permute.xlu0 %568
        %571 = vset.pattern.permute.xlu0 2
        %572 = vperm.xlu0 %571, %v501
        %v573 = vpop.permute.xlu0 %572
        %v575 = vlaneseq
        %v576 = vshrl.u32 %v575, 7
        %v577 = vsub.s32 2, %v576
        %v578 = vrot.slane %v502, %v577
        %v579 = vadd.f32 %v561, %v578
        %v580 = vadd.f32 %v565, %v578
        %v581 = vadd.f32 %v569, %v578
        %v582 = vadd.f32 %v573, %v578
        %583 = vset.pattern.permute.xlu0 3
        %584 = vperm.xlu0 %583, %v498
        %v585 = vpop.permute.xlu0 %584
        %587 = vset.pattern.permute.xlu0 3
        %588 = vperm.xlu0 %587, %v499
        %v589 = vpop.permute.xlu0 %588
        %591 = vset.pattern.permute.xlu0 3
        %592 = vperm.xlu0 %591, %v500
        %v593 = vpop.permute.xlu0 %592
        %595 = vset.pattern.permute.xlu0 3
        %596 = vperm.xlu0 %595, %v501
        %v597 = vpop.permute.xlu0 %596
        %v599 = vlaneseq
        %v600 = vshrl.u32 %v599, 7
        %v601 = vsub.s32 3, %v600
        %v602 = vrot.slane %v502, %v601
        %v603 = vadd.f32 %v585, %v602
        %v604 = vadd.f32 %v589, %v602
        %v605 = vadd.f32 %v593, %v602
        %v606 = vadd.f32 %v597, %v602
        %v607 = vld [vmem:[%s435] sm:$0xff]
        %v608 = vld [vmem:[%s435 + $0x8] sm:$0xff]
        %v609 = vld [vmem:[%s435 + $0x10] sm:$0xff]
        %v610 = vld [vmem:[%s435 + $0x18] sm:$0xff]
        %s611 = sld [smem:[#allocation3]]
        %v612 = vstv %s611
        %v613 = vmul.f32 %v612, %v607
        %v614 = vmul.f32 %v612, %v608
        %v615 = vmul.f32 %v612, %v609
        %v616 = vmul.f32 %v612, %v610
        %v617 = vadd.f32 %v531, %v613
        %v618 = vadd.f32 %v532, %v614
        %v619 = vadd.f32 %v533, %v615
        %v620 = vadd.f32 %v534, %v616
        %s621 = sld [smem:[#allocation3 + $0x80]]
        %v622 = vstv %s621
        %v623 = vmul.f32 %v622, %v607
        %v624 = vmul.f32 %v622, %v608
        %v625 = vmul.f32 %v622, %v609
        %v626 = vmul.f32 %v622, %v610
        %v627 = vadd.f32 %v555, %v623
        %v628 = vadd.f32 %v556, %v624
        %v629 = vadd.f32 %v557, %v625
        %v630 = vadd.f32 %v558, %v626
        %s631 = sld [smem:[#allocation3 + $0x100]]
        %v632 = vstv %s631
        %v633 = vmul.f32 %v632, %v607
        %v634 = vmul.f32 %v632, %v608
        %v635 = vmul.f32 %v632, %v609
        %v636 = vmul.f32 %v632, %v610
        %v637 = vadd.f32 %v579, %v633
        %v638 = vadd.f32 %v580, %v634
        %v639 = vadd.f32 %v581, %v635
        %v640 = vadd.f32 %v582, %v636
        %s641 = sld [smem:[#allocation3 + $0x180]]
        %v642 = vstv %s641
        %v643 = vmul.f32 %v642, %v607
        %v644 = vmul.f32 %v642, %v608
        %v645 = vmul.f32 %v642, %v609
        %v646 = vmul.f32 %v642, %v610
        %v647 = vadd.f32 %v603, %v643
        %v648 = vadd.f32 %v604, %v644
        %v649 = vadd.f32 %v605, %v645
        %v650 = vadd.f32 %v606, %v646
        %s651 = scalar_lea.vmem %s435, 32 [#allocation2]
        %v652 = vld [vmem:[%s651] sm:$0xff]
        %v653 = vld [vmem:[%s651 + $0x8] sm:$0xff]
        %v654 = vld [vmem:[%s651 + $0x10] sm:$0xff]
        %v655 = vld [vmem:[%s651 + $0x18] sm:$0xff]
        %s656 = sld [smem:[#allocation3 + $0x1]]
        %v657 = vstv %s656
        %v658 = vmul.f32 %v657, %v652
        %v659 = vmul.f32 %v657, %v653
        %v660 = vmul.f32 %v657, %v654
        %v661 = vmul.f32 %v657, %v655
        %v662 = vadd.f32 %v617, %v658
        %v663 = vadd.f32 %v618, %v659
        %v664 = vadd.f32 %v619, %v660
        %v665 = vadd.f32 %v620, %v661
        %s666 = sld [smem:[#allocation3 + $0x81]]
        %v667 = vstv %s666
        %v668 = vmul.f32 %v667, %v652
        %v669 = vmul.f32 %v667, %v653
        %v670 = vmul.f32 %v667, %v654
        %v671 = vmul.f32 %v667, %v655
        %v672 = vadd.f32 %v627, %v668
        %v673 = vadd.f32 %v628, %v669
        %v674 = vadd.f32 %v629, %v670
        %v675 = vadd.f32 %v630, %v671
        %s676 = sld [smem:[#allocation3 + $0x101]]
        %v677 = vstv %s676
        %v678 = vmul.f32 %v677, %v652
        %v679 = vmul.f32 %v677, %v653
        %v680 = vmul.f32 %v677, %v654
        %v681 = vmul.f32 %v677, %v655
        %v682 = vadd.f32 %v637, %v678
        %v683 = vadd.f32 %v638, %v679
        %v684 = vadd.f32 %v639, %v680
        %v685 = vadd.f32 %v640, %v681
        %s686 = sld [smem:[#allocation3 + $0x181]]
        %v687 = vstv %s686
        %v688 = vmul.f32 %v687, %v652
        %v689 = vmul.f32 %v687, %v653
        %v690 = vmul.f32 %v687, %v654
        %v691 = vmul.f32 %v687, %v655
        %v692 = vadd.f32 %v647, %v688
        %v693 = vadd.f32 %v648, %v689
        %v694 = vadd.f32 %v649, %v690
        %v695 = vadd.f32 %v650, %v691
        %s696 = scalar_lea.vmem %s435, 64 [#allocation2]
        %v697 = vld [vmem:[%s696] sm:$0xff]
        %v698 = vld [vmem:[%s696 + $0x8] sm:$0xff]
        %v699 = vld [vmem:[%s696 + $0x10] sm:$0xff]
        %v700 = vld [vmem:[%s696 + $0x18] sm:$0xff]
        %s701 = sld [smem:[#allocation3 + $0x2]]
        %v702 = vstv %s701
        %v703 = vmul.f32 %v702, %v697
        %v704 = vmul.f32 %v702, %v698
        %v705 = vmul.f32 %v702, %v699
        %v706 = vmul.f32 %v702, %v700
        %v707 = vadd.f32 %v662, %v703
        %v708 = vadd.f32 %v663, %v704
        %v709 = vadd.f32 %v664, %v705
        %v710 = vadd.f32 %v665, %v706
        %s711 = sld [smem:[#allocation3 + $0x82]]
        %v712 = vstv %s711
        %v713 = vmul.f32 %v712, %v697
        %v714 = vmul.f32 %v712, %v698
        %v715 = vmul.f32 %v712, %v699
        %v716 = vmul.f32 %v712, %v700
        %v717 = vadd.f32 %v672, %v713
        %v718 = vadd.f32 %v673, %v714
        %v719 = vadd.f32 %v674, %v715
        %v720 = vadd.f32 %v675, %v716
        %s721 = sld [smem:[#allocation3 + $0x102]]
        %v722 = vstv %s721
        %v723 = vmul.f32 %v722, %v697
        %v724 = vmul.f32 %v722, %v698
        %v725 = vmul.f32 %v722, %v699
        %v726 = vmul.f32 %v722, %v700
        %v727 = vadd.f32 %v682, %v723
        %v728 = vadd.f32 %v683, %v724
        %v729 = vadd.f32 %v684, %v725
        %v730 = vadd.f32 %v685, %v726
        %s731 = sld [smem:[#allocation3 + $0x182]]
        %v732 = vstv %s731
        %v733 = vmul.f32 %v732, %v697
        %v734 = vmul.f32 %v732, %v698
        %v735 = vmul.f32 %v732, %v699
        %v736 = vmul.f32 %v732, %v700
        %v737 = vadd.f32 %v692, %v733
        %v738 = vadd.f32 %v693, %v734
        %v739 = vadd.f32 %v694, %v735
        %v740 = vadd.f32 %v695, %v736
        %s741 = scalar_lea.vmem %s435, 96 [#allocation2]
        %v742 = vld [vmem:[%s741] sm:$0xff]
        %v743 = vld [vmem:[%s741 + $0x8] sm:$0xff]
        %v744 = vld [vmem:[%s741 + $0x10] sm:$0xff]
        %v745 = vld [vmem:[%s741 + $0x18] sm:$0xff]
        %s746 = sld [smem:[#allocation3 + $0x3]]
        %v747 = vstv %s746
        %v748 = vmul.f32 %v747, %v742
        %v749 = vmul.f32 %v747, %v743
        %v750 = vmul.f32 %v747, %v744
        %v751 = vmul.f32 %v747, %v745
        %v752 = vadd.f32 %v707, %v748
        %v753 = vadd.f32 %v708, %v749
        %v754 = vadd.f32 %v709, %v750
        %v755 = vadd.f32 %v710, %v751
        %s756 = sld [smem:[#allocation3 + $0x83]]
        %v757 = vstv %s756
        %v758 = vmul.f32 %v757, %v742
        %v759 = vmul.f32 %v757, %v743
        %v760 = vmul.f32 %v757, %v744
        %v761 = vmul.f32 %v757, %v745
        %v762 = vadd.f32 %v717, %v758
        %v763 = vadd.f32 %v718, %v759
        %v764 = vadd.f32 %v719, %v760
        %v765 = vadd.f32 %v720, %v761
        %s766 = sld [smem:[#allocation3 + $0x103]]
        %v767 = vstv %s766
        %v768 = vmul.f32 %v767, %v742
        %v769 = vmul.f32 %v767, %v743
        %v770 = vmul.f32 %v767, %v744
        %v771 = vmul.f32 %v767, %v745
        %v772 = vadd.f32 %v727, %v768
        %v773 = vadd.f32 %v728, %v769
        %v774 = vadd.f32 %v729, %v770
        %v775 = vadd.f32 %v730, %v771
        %s776 = sld [smem:[#allocation3 + $0x183]]
        %v777 = vstv %s776
        %v778 = vmul.f32 %v777, %v742
        %v779 = vmul.f32 %v777, %v743
        %v780 = vmul.f32 %v777, %v744
        %v781 = vmul.f32 %v777, %v745
        %v782 = vadd.f32 %v737, %v778
        %v783 = vadd.f32 %v738, %v779
        %v784 = vadd.f32 %v739, %v780
        %v785 = vadd.f32 %v740, %v781
        %s786 = scalar_lea.vmem %s435, 128 [#allocation2]
        %v787 = vld [vmem:[%s786] sm:$0xff]
        %v788 = vld [vmem:[%s786 + $0x8] sm:$0xff]
        %v789 = vld [vmem:[%s786 + $0x10] sm:$0xff]
        %v790 = vld [vmem:[%s786 + $0x18] sm:$0xff]
        %s791 = sld [smem:[#allocation3 + $0x4]]
        %v792 = vstv %s791
        %v793 = vmul.f32 %v792, %v787
        %v794 = vmul.f32 %v792, %v788
        %v795 = vmul.f32 %v792, %v789
        %v796 = vmul.f32 %v792, %v790
        %v797 = vadd.f32 %v752, %v793
        %v798 = vadd.f32 %v753, %v794
        %v799 = vadd.f32 %v754, %v795
        %v800 = vadd.f32 %v755, %v796
        %s801 = sld [smem:[#allocation3 + $0x84]]
        %v802 = vstv %s801
        %v803 = vmul.f32 %v802, %v787
        %v804 = vmul.f32 %v802, %v788
        %v805 = vmul.f32 %v802, %v789
        %v806 = vmul.f32 %v802, %v790
        %v807 = vadd.f32 %v762, %v803
        %v808 = vadd.f32 %v763, %v804
        %v809 = vadd.f32 %v764, %v805
        %v810 = vadd.f32 %v765, %v806
        %s811 = sld [smem:[#allocation3 + $0x104]]
        %v812 = vstv %s811
        %v813 = vmul.f32 %v812, %v787
        %v814 = vmul.f32 %v812, %v788
        %v815 = vmul.f32 %v812, %v789
        %v816 = vmul.f32 %v812, %v790
        %v817 = vadd.f32 %v772, %v813
        %v818 = vadd.f32 %v773, %v814
        %v819 = vadd.f32 %v774, %v815
        %v820 = vadd.f32 %v775, %v816
        %s821 = sld [smem:[#allocation3 + $0x184]]
        %v822 = vstv %s821
        %v823 = vmul.f32 %v822, %v787
        %v824 = vmul.f32 %v822, %v788
        %v825 = vmul.f32 %v822, %v789
        %v826 = vmul.f32 %v822, %v790
        %v827 = vadd.f32 %v782, %v823
        %v828 = vadd.f32 %v783, %v824
        %v829 = vadd.f32 %v784, %v825
        %v830 = vadd.f32 %v785, %v826
        %s831 = scalar_lea.vmem %s435, 160 [#allocation2]
        %v832 = vld [vmem:[%s831] sm:$0xff]
        %v833 = vld [vmem:[%s831 + $0x8] sm:$0xff]
        %v834 = vld [vmem:[%s831 + $0x10] sm:$0xff]
        %v835 = vld [vmem:[%s831 + $0x18] sm:$0xff]
        %s836 = sld [smem:[#allocation3 + $0x5]]
        %v837 = vstv %s836
        %v838 = vmul.f32 %v837, %v832
        %v839 = vmul.f32 %v837, %v833
        %v840 = vmul.f32 %v837, %v834
        %v841 = vmul.f32 %v837, %v835
        %v842 = vadd.f32 %v797, %v838
        %v843 = vadd.f32 %v798, %v839
        %v844 = vadd.f32 %v799, %v840
        %v845 = vadd.f32 %v800, %v841
        %s846 = sld [smem:[#allocation3 + $0x85]]
        %v847 = vstv %s846
        %v848 = vmul.f32 %v847, %v832
        %v849 = vmul.f32 %v847, %v833
        %v850 = vmul.f32 %v847, %v834
        %v851 = vmul.f32 %v847, %v835
        %v852 = vadd.f32 %v807, %v848
        %v853 = vadd.f32 %v808, %v849
        %v854 = vadd.f32 %v809, %v850
        %v855 = vadd.f32 %v810, %v851
        %s856 = sld [smem:[#allocation3 + $0x105]]
        %v857 = vstv %s856
        %v858 = vmul.f32 %v857, %v832
        %v859 = vmul.f32 %v857, %v833
        %v860 = vmul.f32 %v857, %v834
        %v861 = vmul.f32 %v857, %v835
        %v862 = vadd.f32 %v817, %v858
        %v863 = vadd.f32 %v818, %v859
        %v864 = vadd.f32 %v819, %v860
        %v865 = vadd.f32 %v820, %v861
        %s866 = sld [smem:[#allocation3 + $0x185]]
        %v867 = vstv %s866
        %v868 = vmul.f32 %v867, %v832
        %v869 = vmul.f32 %v867, %v833
        %v870 = vmul.f32 %v867, %v834
        %v871 = vmul.f32 %v867, %v835
        %v872 = vadd.f32 %v827, %v868
        %v873 = vadd.f32 %v828, %v869
        %v874 = vadd.f32 %v829, %v870
        %v875 = vadd.f32 %v830, %v871
        %s876 = scalar_lea.vmem %s435, 192 [#allocation2]
        %v877 = vld [vmem:[%s876] sm:$0xff]
        %v878 = vld [vmem:[%s876 + $0x8] sm:$0xff]
        %v879 = vld [vmem:[%s876 + $0x10] sm:$0xff]
        %v880 = vld [vmem:[%s876 + $0x18] sm:$0xff]
        %s881 = sld [smem:[#allocation3 + $0x6]]
        %v882 = vstv %s881
        %v883 = vmul.f32 %v882, %v877
        %v884 = vmul.f32 %v882, %v878
        %v885 = vmul.f32 %v882, %v879
        %v886 = vmul.f32 %v882, %v880
        %v887 = vadd.f32 %v842, %v883
        %v888 = vadd.f32 %v843, %v884
        %v889 = vadd.f32 %v844, %v885
        %v890 = vadd.f32 %v845, %v886
        %s891 = sld [smem:[#allocation3 + $0x86]]
        %v892 = vstv %s891
        %v893 = vmul.f32 %v892, %v877
        %v894 = vmul.f32 %v892, %v878
        %v895 = vmul.f32 %v892, %v879
        %v896 = vmul.f32 %v892, %v880
        %v897 = vadd.f32 %v852, %v893
        %v898 = vadd.f32 %v853, %v894
        %v899 = vadd.f32 %v854, %v895
        %v900 = vadd.f32 %v855, %v896
        %s901 = sld [smem:[#allocation3 + $0x106]]
        %v902 = vstv %s901
        %v903 = vmul.f32 %v902, %v877
        %v904 = vmul.f32 %v902, %v878
        %v905 = vmul.f32 %v902, %v879
        %v906 = vmul.f32 %v902, %v880
        %v907 = vadd.f32 %v862, %v903
        %v908 = vadd.f32 %v863, %v904
        %v909 = vadd.f32 %v864, %v905
        %v910 = vadd.f32 %v865, %v906
        %s911 = sld [smem:[#allocation3 + $0x186]]
        %v912 = vstv %s911
        %v913 = vmul.f32 %v912, %v877
        %v914 = vmul.f32 %v912, %v878
        %v915 = vmul.f32 %v912, %v879
        %v916 = vmul.f32 %v912, %v880
        %v917 = vadd.f32 %v872, %v913
        %v918 = vadd.f32 %v873, %v914
        %v919 = vadd.f32 %v874, %v915
        %v920 = vadd.f32 %v875, %v916
        %s921 = scalar_lea.vmem %s435, 224 [#allocation2]
        %v922 = vld [vmem:[%s921] sm:$0xff]
        %v923 = vld [vmem:[%s921 + $0x8] sm:$0xff]
        %v924 = vld [vmem:[%s921 + $0x10] sm:$0xff]
        %v925 = vld [vmem:[%s921 + $0x18] sm:$0xff]
        %s926 = sld [smem:[#allocation3 + $0x7]]
        %v927 = vstv %s926
        %v928 = vmul.f32 %v927, %v922
        %v929 = vmul.f32 %v927, %v923
        %v930 = vmul.f32 %v927, %v924
        %v931 = vmul.f32 %v927, %v925
        %v932 = vadd.f32 %v887, %v928
        %v933 = vadd.f32 %v888, %v929
        %v934 = vadd.f32 %v889, %v930
        %v935 = vadd.f32 %v890, %v931
        %s936 = sld [smem:[#allocation3 + $0x87]]
        %v937 = vstv %s936
        %v938 = vmul.f32 %v937, %v922
        %v939 = vmul.f32 %v937, %v923
        %v940 = vmul.f32 %v937, %v924
        %v941 = vmul.f32 %v937, %v925
        %v942 = vadd.f32 %v897, %v938
        %v943 = vadd.f32 %v898, %v939
        %v944 = vadd.f32 %v899, %v940
        %v945 = vadd.f32 %v900, %v941
        %s946 = sld [smem:[#allocation3 + $0x107]]
        %v947 = vstv %s946
        %v948 = vmul.f32 %v947, %v922
        %v949 = vmul.f32 %v947, %v923
        %v950 = vmul.f32 %v947, %v924
        %v951 = vmul.f32 %v947, %v925
        %v952 = vadd.f32 %v907, %v948
        %v953 = vadd.f32 %v908, %v949
        %v954 = vadd.f32 %v909, %v950
        %v955 = vadd.f32 %v910, %v951
        %s956 = sld [smem:[#allocation3 + $0x187]]
        %v957 = vstv %s956
        %v958 = vmul.f32 %v957, %v922
        %v959 = vmul.f32 %v957, %v923
        %v960 = vmul.f32 %v957, %v924
        %v961 = vmul.f32 %v957, %v925
        %v962 = vadd.f32 %v917, %v958
        %v963 = vadd.f32 %v918, %v959
        %v964 = vadd.f32 %v919, %v960
        %v965 = vadd.f32 %v920, %v961
        %v966 = vmul.f32 %v932, 0.2
        %v967 = vmul.f32 %v933, 0.2
        %v968 = vmul.f32 %v934, 0.2
        %v969 = vmul.f32 %v935, 0.2
        %v970 = vmax.f32 %v932, %v966
        %v971 = vmax.f32 %v933, %v967
        %v972 = vmax.f32 %v934, %v968
        %v973 = vmax.f32 %v935, %v969
        %v974 = vadd.f32 %v970, %v503
        %v975 = vadd.f32 %v971, %v504
        %v976 = vadd.f32 %v972, %v505
        %v977 = vadd.f32 %v973, %v506
        %978 = vmax.xlane.f32.xlu0 %v974
        %v979 = vpop.xlane.xlu0 %978
        %980 = vmax.xlane.f32.xlu0 %v975
        %v981 = vpop.xlane.xlu0 %980
        %982 = vmax.xlane.f32.xlu0 %v976
        %v983 = vpop.xlane.xlu0 %982
        %984 = vmax.xlane.f32.xlu0 %v977
        %v985 = vpop.xlane.xlu0 %984
        %v986 = vsub.f32 %v974, %v979
        %v987 = vsub.f32 %v975, %v981
        %v988 = vsub.f32 %v976, %v983
        %v989 = vsub.f32 %v977, %v985
        %v990 = vmul.f32 %v986, 1.442695
        %v991 = vpow.pop %v990
        %v992 = vmul.f32 %v987, 1.442695
        %v993 = vpow.pop %v992
        %v994 = vmul.f32 %v988, 1.442695
        %v995 = vpow.pop %v994
        %v996 = vmul.f32 %v989, 1.442695
        %v997 = vpow.pop %v996
        %998 = vadd.xlane.f32.xlu0 %v991
        %v999 = vpop.xlane.xlu0 %998
        %1000 = vadd.xlane.f32.xlu0 %v993
        %v1001 = vpop.xlane.xlu0 %1000
        %1002 = vadd.xlane.f32.xlu0 %v995
        %v1003 = vpop.xlane.xlu0 %1002
        %1004 = vadd.xlane.f32.xlu0 %v997
        %v1005 = vpop.xlane.xlu0 %1004
        %v1006 = vld [vmem:[%s2] sm:$0xff]
        %v1007 = vld [vmem:[%s2 + $0x8] sm:$0xff]
        %v1008 = vld [vmem:[%s2 + $0x10] sm:$0xff]
        %v1009 = vld [vmem:[%s2 + $0x18] sm:$0xff]
        %v1010 = vld [vmem:[%s2 + $0x20] sm:$0xff]
        %v1011 = vld [vmem:[%s2 + $0x28] sm:$0xff]
        %v1012 = vld [vmem:[%s2 + $0x30] sm:$0xff]
        %v1013 = vld [vmem:[%s2 + $0x38] sm:$0xff]
        %v1014 = vld [vmem:[%s2 + $0x40] sm:$0xff]
        %v1015 = vld [vmem:[%s2 + $0x48] sm:$0xff]
        %v1016 = vld [vmem:[%s2 + $0x50] sm:$0xff]
        %v1017 = vld [vmem:[%s2 + $0x58] sm:$0xff]
        %v1018 = vld [vmem:[%s2 + $0x60] sm:$0xff]
        %v1019 = vld [vmem:[%s2 + $0x68] sm:$0xff]
        %v1020 = vld [vmem:[%s2 + $0x70] sm:$0xff]
        %v1021 = vld [vmem:[%s2 + $0x78] sm:$0xff]
        %1022 = vmatprep.subr.mxu0 0.0
        %1023 = vmatpush1.msra.mxu0 %v1006
        %1024 = vmatprep.subr.mxu0 0.0
        %1025 = vmatpush1.msra.mxu0 %v1007
        %1026 = vmatprep.subr.mxu0 0.0
        %1027 = vmatpush1.msra.mxu0 %v1008
        %1028 = vmatprep.subr.mxu0 0.0
        %1029 = vmatpush1.msra.mxu0 %v1009
        %1030 = vmatprep.subr.mxu0 0.0
        %1031 = vmatpush1.msra.mxu0 %v1010
        %1032 = vmatprep.subr.mxu0 0.0
        %1033 = vmatpush1.msra.mxu0 %v1011
        %1034 = vmatprep.subr.mxu0 0.0
        %1035 = vmatpush1.msra.mxu0 %v1012
        %1036 = vmatprep.subr.mxu0 0.0
        %1037 = vmatpush1.msra.mxu0 %v1013
        %1038 = vmatprep.subr.mxu0 0.0
        %1039 = vmatpush1.msra.mxu0 %v1014
        %1040 = vmatprep.subr.mxu0 0.0
        %1041 = vmatpush1.msra.mxu0 %v1015
        %1042 = vmatprep.subr.mxu0 0.0
        %1043 = vmatpush1.msra.mxu0 %v1016
        %1044 = vmatprep.subr.mxu0 0.0
        %1045 = vmatpush1.msra.mxu0 %v1017
        %1046 = vmatprep.subr.mxu0 0.0
        %1047 = vmatpush1.msra.mxu0 %v1018
        %1048 = vmatprep.subr.mxu0 0.0
        %1049 = vmatpush1.msra.mxu0 %v1019
        %1050 = vmatprep.subr.mxu0 0.0
        %1051 = vmatpush1.msra.mxu0 %v1020
        %1052 = vmatprep.subr.mxu0 0.0
        %1053 = vmatpush1.msra.mxu0 %v1021
        %1054 = vmatprep.subr.mxu0 0.0
        %1055 = vmatpush1.msra.mxu0 0.0
        %1056 = vmatprep.subr.mxu0 0.0
        %1057 = vmatpush1.msra.mxu0 0.0
        %1058 = vmatprep.subr.mxu0 0.0
        %1059 = vmatpush1.msra.mxu0 0.0
        %1060 = vmatprep.subr.mxu0 0.0
        %1061 = vmatpush1.msra.mxu0 0.0
        %1062 = vmatprep.subr.mxu0 0.0
        %1063 = vmatpush1.msra.mxu0 0.0
        %1064 = vmatprep.subr.mxu0 0.0
        %1065 = vmatpush1.msra.mxu0 0.0
        %1066 = vmatprep.subr.mxu0 0.0
        %1067 = vmatpush1.msra.mxu0 0.0
        %1068 = vmatprep.subr.mxu0 0.0
        %1069 = vmatpush1.msra.mxu0 0.0
        %1070 = vmatprep.subr.mxu0 0.0
        %1071 = vmatpush1.msra.mxu0 0.0
        %1072 = vmatprep.subr.mxu0 0.0
        %1073 = vmatpush1.msra.mxu0 0.0
        %1074 = vmatprep.subr.mxu0 0.0
        %1075 = vmatpush1.msra.mxu0 0.0
        %1076 = vmatprep.subr.mxu0 0.0
        %1077 = vmatpush1.msra.mxu0 0.0
        %1078 = vmatprep.subr.mxu0 0.0
        %1079 = vmatpush1.msra.mxu0 0.0
        %1080 = vmatprep.subr.mxu0 0.0
        %1081 = vmatpush1.msra.mxu0 0.0
        %1082 = vmatprep.subr.mxu0 0.0
        %1083 = vmatpush1.msra.mxu0 0.0
        %1084 = vmatprep.subr.mxu0 0.0
        %1085 = vmatpush1.msra.mxu0 0.0
        %1086 = vmatprep.mubr.f32.mxu0 0.0
        %1087 = vmatmul.mubr.f32.gmra.mrb[0].mxu0 %v991
        %v1088 = vpop.f32.mrb[0].mxu0
        %v1089 = vadd.f32 0.0, %v1088
        %v1090 = vpop.f32.mrb[0].mxu0
        %1091 = vmatprep.mubr.f32.mxu0 0.0
        %1092 = vmatmul.mubr.f32.gmra.mrb[0].mxu0 %v993
        %v1093 = vpop.f32.mrb[0].mxu0
        %v1094 = vadd.f32 0.0, %v1093
        %v1095 = vpop.f32.mrb[0].mxu0
        %1096 = vmatprep.mubr.f32.mxu0 0.0
        %1097 = vmatmul.mubr.f32.gmra.mrb[0].mxu0 %v995
        %v1098 = vpop.f32.mrb[0].mxu0
        %v1099 = vadd.f32 0.0, %v1098
        %v1100 = vpop.f32.mrb[0].mxu0
        %1101 = vmatprep.mubr.f32.mxu0 0.0
        %1102 = vmatmul.mubr.f32.gmra.mrb[0].mxu0 %v997
        %v1103 = vpop.f32.mrb[0].mxu0
        %v1104 = vadd.f32 0.0, %v1103
        %v1105 = vpop.f32.mrb[0].mxu0
        %1106 = vdwg.mxu0
        %v1107 = vrcp.pop %v999
        %v1108 = vrcp.pop %v1001
        %v1109 = vrcp.pop %v1003
        %v1110 = vrcp.pop %v1005
        %v1111 = vmul.f32 %v1089, %v1107
        %v1112 = vmul.f32 %v1094, %v1108
        %v1113 = vmul.f32 %v1099, %v1109
        %v1114 = vmul.f32 %v1104, %v1110
        %v1115 = vmul.f32 %v942, 0.2
        %v1116 = vmul.f32 %v943, 0.2
        %v1117 = vmul.f32 %v944, 0.2
        %v1118 = vmul.f32 %v945, 0.2
        %v1119 = vmax.f32 %v942, %v1115
        %v1120 = vmax.f32 %v943, %v1116
        %v1121 = vmax.f32 %v944, %v1117
        %v1122 = vmax.f32 %v945, %v1118
        %v1123 = vadd.f32 %v1119, %v503
        %v1124 = vadd.f32 %v1120, %v504
        %v1125 = vadd.f32 %v1121, %v505
        %v1126 = vadd.f32 %v1122, %v506
        %1127 = vmax.xlane.f32.xlu0 %v1123
        %v1128 = vpop.xlane.xlu0 %1127
        %1129 = vmax.xlane.f32.xlu0 %v1124
        %v1130 = vpop.xlane.xlu0 %1129
        %1131 = vmax.xlane.f32.xlu0 %v1125
        %v1132 = vpop.xlane.xlu0 %1131
        %1133 = vmax.xlane.f32.xlu0 %v1126
        %v1134 = vpop.xlane.xlu0 %1133
        %v1135 = vsub.f32 %v1123, %v1128
        %v1136 = vsub.f32 %v1124, %v1130
        %v1137 = vsub.f32 %v1125, %v1132
        %v1138 = vsub.f32 %v1126, %v1134
        %v1139 = vmul.f32 %v1135, 1.442695
        %v1140 = vpow.pop %v1139
        %v1141 = vmul.f32 %v1136, 1.442695
        %v1142 = vpow.pop %v1141
        %v1143 = vmul.f32 %v1137, 1.442695
        %v1144 = vpow.pop %v1143
        %v1145 = vmul.f32 %v1138, 1.442695
        %v1146 = vpow.pop %v1145
        %1147 = vadd.xlane.f32.xlu0 %v1140
        %v1148 = vpop.xlane.xlu0 %1147
        %1149 = vadd.xlane.f32.xlu0 %v1142
        %v1150 = vpop.xlane.xlu0 %1149
        %1151 = vadd.xlane.f32.xlu0 %v1144
        %v1152 = vpop.xlane.xlu0 %1151
        %1153 = vadd.xlane.f32.xlu0 %v1146
        %v1154 = vpop.xlane.xlu0 %1153
        %s1155 = scalar_lea.vmem %s2, 128
        %v1156 = vld [vmem:[%s1155] sm:$0xff]
        %v1157 = vld [vmem:[%s1155 + $0x8] sm:$0xff]
        %v1158 = vld [vmem:[%s1155 + $0x10] sm:$0xff]
        %v1159 = vld [vmem:[%s1155 + $0x18] sm:$0xff]
        %v1160 = vld [vmem:[%s1155 + $0x20] sm:$0xff]
        %v1161 = vld [vmem:[%s1155 + $0x28] sm:$0xff]
        %v1162 = vld [vmem:[%s1155 + $0x30] sm:$0xff]
        %v1163 = vld [vmem:[%s1155 + $0x38] sm:$0xff]
        %v1164 = vld [vmem:[%s1155 + $0x40] sm:$0xff]
        %v1165 = vld [vmem:[%s1155 + $0x48] sm:$0xff]
        %v1166 = vld [vmem:[%s1155 + $0x50] sm:$0xff]
        %v1167 = vld [vmem:[%s1155 + $0x58] sm:$0xff]
        %v1168 = vld [vmem:[%s1155 + $0x60] sm:$0xff]
        %v1169 = vld [vmem:[%s1155 + $0x68] sm:$0xff]
        %v1170 = vld [vmem:[%s1155 + $0x70] sm:$0xff]
        %v1171 = vld [vmem:[%s1155 + $0x78] sm:$0xff]
        %1172 = vmatprep.subr.mxu0 0.0
        %1173 = vmatpush1.msra.mxu0 %v1156
        %1174 = vmatprep.subr.mxu0 0.0
        %1175 = vmatpush1.msra.mxu0 %v1157
        %1176 = vmatprep.subr.mxu0 0.0
        %1177 = vmatpush1.msra.mxu0 %v1158
        %1178 = vmatprep.subr.mxu0 0.0
        %1179 = vmatpush1.msra.mxu0 %v1159
        %1180 = vmatprep.subr.mxu0 0.0
        %1181 = vmatpush1.msra.mxu0 %v1160
        %1182 = vmatprep.subr.mxu0 0.0
        %1183 = vmatpush1.msra.mxu0 %v1161
        %1184 = vmatprep.subr.mxu0 0.0
        %1185 = vmatpush1.msra.mxu0 %v1162
        %1186 = vmatprep.subr.mxu0 0.0
        %1187 = vmatpush1.msra.mxu0 %v1163
        %1188 = vmatprep.subr.mxu0 0.0
        %1189 = vmatpush1.msra.mxu0 %v1164
        %1190 = vmatprep.subr.mxu0 0.0
        %1191 = vmatpush1.msra.mxu0 %v1165
        %1192 = vmatprep.subr.mxu0 0.0
        %1193 = vmatpush1.msra.mxu0 %v1166
        %1194 = vmatprep.subr.mxu0 0.0
        %1195 = vmatpush1.msra.mxu0 %v1167
        %1196 = vmatprep.subr.mxu0 0.0
        %1197 = vmatpush1.msra.mxu0 %v1168
        %1198 = vmatprep.subr.mxu0 0.0
        %1199 = vmatpush1.msra.mxu0 %v1169
        %1200 = vmatprep.subr.mxu0 0.0
        %1201 = vmatpush1.msra.mxu0 %v1170
        %1202 = vmatprep.subr.mxu0 0.0
        %1203 = vmatpush1.msra.mxu0 %v1171
        %1204 = vmatprep.subr.mxu0 0.0
        %1205 = vmatpush1.msra.mxu0 0.0
        %1206 = vmatprep.subr.mxu0 0.0
        %1207 = vmatpush1.msra.mxu0 0.0
        %1208 = vmatprep.subr.mxu0 0.0
        %1209 = vmatpush1.msra.mxu0 0.0
        %1210 = vmatprep.subr.mxu0 0.0
        %1211 = vmatpush1.msra.mxu0 0.0
        %1212 = vmatprep.subr.mxu0 0.0
        %1213 = vmatpush1.msra.mxu0 0.0
        %1214 = vmatprep.subr.mxu0 0.0
        %1215 = vmatpush1.msra.mxu0 0.0
        %1216 = vmatprep.subr.mxu0 0.0
        %1217 = vmatpush1.msra.mxu0 0.0
        %1218 = vmatprep.subr.mxu0 0.0
        %1219 = vmatpush1.msra.mxu0 0.0
        %1220 = vmatprep.subr.mxu0 0.0
        %1221 = vmatpush1.msra.mxu0 0.0
        %1222 = vmatprep.subr.mxu0 0.0
        %1223 = vmatpush1.msra.mxu0 0.0
        %1224 = vmatprep.subr.mxu0 0.0
        %1225 = vmatpush1.msra.mxu0 0.0
        %1226 = vmatprep.subr.mxu0 0.0
        %1227 = vmatpush1.msra.mxu0 0.0
        %1228 = vmatprep.subr.mxu0 0.0
        %1229 = vmatpush1.msra.mxu0 0.0
        %1230 = vmatprep.subr.mxu0 0.0
        %1231 = vmatpush1.msra.mxu0 0.0
        %1232 = vmatprep.subr.mxu0 0.0
        %1233 = vmatpush1.msra.mxu0 0.0
        %1234 = vmatprep.subr.mxu0 0.0
        %1235 = vmatpush1.msra.mxu0 0.0
        %1236 = vmatprep.mubr.f32.mxu0 0.0
        %1237 = vmatmul.mubr.f32.gmra.mrb[0].mxu0 %v1140
        %v1238 = vpop.f32.mrb[0].mxu0
        %v1239 = vadd.f32 0.0, %v1238
        %v1240 = vpop.f32.mrb[0].mxu0
        %1241 = vmatprep.mubr.f32.mxu0 0.0
        %1242 = vmatmul.mubr.f32.gmra.mrb[0].mxu0 %v1142
        %v1243 = vpop.f32.mrb[0].mxu0
        %v1244 = vadd.f32 0.0, %v1243
        %v1245 = vpop.f32.mrb[0].mxu0
        %1246 = vmatprep.mubr.f32.mxu0 0.0
        %1247 = vmatmul.mubr.f32.gmra.mrb[0].mxu0 %v1144
        %v1248 = vpop.f32.mrb[0].mxu0
        %v1249 = vadd.f32 0.0, %v1248
        %v1250 = vpop.f32.mrb[0].mxu0
        %1251 = vmatprep.mubr.f32.mxu0 0.0
        %1252 = vmatmul.mubr.f32.gmra.mrb[0].mxu0 %v1146
        %v1253 = vpop.f32.mrb[0].mxu0
        %v1254 = vadd.f32 0.0, %v1253
        %v1255 = vpop.f32.mrb[0].mxu0
        %1256 = vdwg.mxu0
        %v1257 = vrcp.pop %v1148
        %v1258 = vrcp.pop %v1150
        %v1259 = vrcp.pop %v1152
        %v1260 = vrcp.pop %v1154
        %v1261 = vmul.f32 %v1239, %v1257
        %v1262 = vmul.f32 %v1244, %v1258
        %v1263 = vmul.f32 %v1249, %v1259
        %v1264 = vmul.f32 %v1254, %v1260
        %v1265 = vmul.f32 %v952, 0.2
        %v1266 = vmul.f32 %v953, 0.2
        %v1267 = vmul.f32 %v954, 0.2
        %v1268 = vmul.f32 %v955, 0.2
        %v1269 = vmax.f32 %v952, %v1265
        %v1270 = vmax.f32 %v953, %v1266
        %v1271 = vmax.f32 %v954, %v1267
        %v1272 = vmax.f32 %v955, %v1268
        %v1273 = vadd.f32 %v1269, %v503
        %v1274 = vadd.f32 %v1270, %v504
        %v1275 = vadd.f32 %v1271, %v505
        %v1276 = vadd.f32 %v1272, %v506
        %1277 = vmax.xlane.f32.xlu0 %v1273
        %v1278 = vpop.xlane.xlu0 %1277
        %1279 = vmax.xlane.f32.xlu0 %v1274
        %v1280 = vpop.xlane.xlu0 %1279
        %1281 = vmax.xlane.f32.xlu0 %v1275
        %v1282 = vpop.xlane.xlu0 %1281
        %1283 = vmax.xlane.f32.xlu0 %v1276
        %v1284 = vpop.xlane.xlu0 %1283
        %v1285 = vsub.f32 %v1273, %v1278
        %v1286 = vsub.f32 %v1274, %v1280
        %v1287 = vsub.f32 %v1275, %v1282
        %v1288 = vsub.f32 %v1276, %v1284
        %v1289 = vmul.f32 %v1285, 1.442695
        %v1290 = vpow.pop %v1289
        %v1291 = vmul.f32 %v1286, 1.442695
        %v1292 = vpow.pop %v1291
        %v1293 = vmul.f32 %v1287, 1.442695
        %v1294 = vpow.pop %v1293
        %v1295 = vmul.f32 %v1288, 1.442695
        %v1296 = vpow.pop %v1295
        %1297 = vadd.xlane.f32.xlu0 %v1290
        %v1298 = vpop.xlane.xlu0 %1297
        %1299 = vadd.xlane.f32.xlu0 %v1292
        %v1300 = vpop.xlane.xlu0 %1299
        %1301 = vadd.xlane.f32.xlu0 %v1294
        %v1302 = vpop.xlane.xlu0 %1301
        %1303 = vadd.xlane.f32.xlu0 %v1296
        %v1304 = vpop.xlane.xlu0 %1303
        %s1305 = scalar_lea.vmem %s2, 256
        %v1306 = vld [vmem:[%s1305] sm:$0xff]
        %v1307 = vld [vmem:[%s1305 + $0x8] sm:$0xff]
        %v1308 = vld [vmem:[%s1305 + $0x10] sm:$0xff]
        %v1309 = vld [vmem:[%s1305 + $0x18] sm:$0xff]
        %v1310 = vld [vmem:[%s1305 + $0x20] sm:$0xff]
        %v1311 = vld [vmem:[%s1305 + $0x28] sm:$0xff]
        %v1312 = vld [vmem:[%s1305 + $0x30] sm:$0xff]
        %v1313 = vld [vmem:[%s1305 + $0x38] sm:$0xff]
        %v1314 = vld [vmem:[%s1305 + $0x40] sm:$0xff]
        %v1315 = vld [vmem:[%s1305 + $0x48] sm:$0xff]
        %v1316 = vld [vmem:[%s1305 + $0x50] sm:$0xff]
        %v1317 = vld [vmem:[%s1305 + $0x58] sm:$0xff]
        %v1318 = vld [vmem:[%s1305 + $0x60] sm:$0xff]
        %v1319 = vld [vmem:[%s1305 + $0x68] sm:$0xff]
        %v1320 = vld [vmem:[%s1305 + $0x70] sm:$0xff]
        %v1321 = vld [vmem:[%s1305 + $0x78] sm:$0xff]
        %1322 = vmatprep.subr.mxu0 0.0
        %1323 = vmatpush1.msra.mxu0 %v1306
        %1324 = vmatprep.subr.mxu0 0.0
        %1325 = vmatpush1.msra.mxu0 %v1307
        %1326 = vmatprep.subr.mxu0 0.0
        %1327 = vmatpush1.msra.mxu0 %v1308
        %1328 = vmatprep.subr.mxu0 0.0
        %1329 = vmatpush1.msra.mxu0 %v1309
        %1330 = vmatprep.subr.mxu0 0.0
        %1331 = vmatpush1.msra.mxu0 %v1310
        %1332 = vmatprep.subr.mxu0 0.0
        %1333 = vmatpush1.msra.mxu0 %v1311
        %1334 = vmatprep.subr.mxu0 0.0
        %1335 = vmatpush1.msra.mxu0 %v1312
        %1336 = vmatprep.subr.mxu0 0.0
        %1337 = vmatpush1.msra.mxu0 %v1313
        %1338 = vmatprep.subr.mxu0 0.0
        %1339 = vmatpush1.msra.mxu0 %v1314
        %1340 = vmatprep.subr.mxu0 0.0
        %1341 = vmatpush1.msra.mxu0 %v1315
        %1342 = vmatprep.subr.mxu0 0.0
        %1343 = vmatpush1.msra.mxu0 %v1316
        %1344 = vmatprep.subr.mxu0 0.0
        %1345 = vmatpush1.msra.mxu0 %v1317
        %1346 = vmatprep.subr.mxu0 0.0
        %1347 = vmatpush1.msra.mxu0 %v1318
        %1348 = vmatprep.subr.mxu0 0.0
        %1349 = vmatpush1.msra.mxu0 %v1319
        %1350 = vmatprep.subr.mxu0 0.0
        %1351 = vmatpush1.msra.mxu0 %v1320
        %1352 = vmatprep.subr.mxu0 0.0
        %1353 = vmatpush1.msra.mxu0 %v1321
        %1354 = vmatprep.subr.mxu0 0.0
        %1355 = vmatpush1.msra.mxu0 0.0
        %1356 = vmatprep.subr.mxu0 0.0
        %1357 = vmatpush1.msra.mxu0 0.0
        %1358 = vmatprep.subr.mxu0 0.0
        %1359 = vmatpush1.msra.mxu0 0.0
        %1360 = vmatprep.subr.mxu0 0.0
        %1361 = vmatpush1.msra.mxu0 0.0
        %1362 = vmatprep.subr.mxu0 0.0
        %1363 = vmatpush1.msra.mxu0 0.0
        %1364 = vmatprep.subr.mxu0 0.0
        %1365 = vmatpush1.msra.mxu0 0.0
        %1366 = vmatprep.subr.mxu0 0.0
        %1367 = vmatpush1.msra.mxu0 0.0
        %1368 = vmatprep.subr.mxu0 0.0
        %1369 = vmatpush1.msra.mxu0 0.0
        %1370 = vmatprep.subr.mxu0 0.0
        %1371 = vmatpush1.msra.mxu0 0.0
        %1372 = vmatprep.subr.mxu0 0.0
        %1373 = vmatpush1.msra.mxu0 0.0
        %1374 = vmatprep.subr.mxu0 0.0
        %1375 = vmatpush1.msra.mxu0 0.0
        %1376 = vmatprep.subr.mxu0 0.0
        %1377 = vmatpush1.msra.mxu0 0.0
        %1378 = vmatprep.subr.mxu0 0.0
        %1379 = vmatpush1.msra.mxu0 0.0
        %1380 = vmatprep.subr.mxu0 0.0
        %1381 = vmatpush1.msra.mxu0 0.0
        %1382 = vmatprep.subr.mxu0 0.0
        %1383 = vmatpush1.msra.mxu0 0.0
        %1384 = vmatprep.subr.mxu0 0.0
        %1385 = vmatpush1.msra.mxu0 0.0
        %1386 = vmatprep.mubr.f32.mxu0 0.0
        %1387 = vmatmul.mubr.f32.gmra.mrb[0].mxu0 %v1290
        %v1388 = vpop.f32.mrb[0].mxu0
        %v1389 = vadd.f32 0.0, %v1388
        %v1390 = vpop.f32.mrb[0].mxu0
        %1391 = vmatprep.mubr.f32.mxu0 0.0
        %1392 = vmatmul.mubr.f32.gmra.mrb[0].mxu0 %v1292
        %v1393 = vpop.f32.mrb[0].mxu0
        %v1394 = vadd.f32 0.0, %v1393
        %v1395 = vpop.f32.mrb[0].mxu0
        %1396 = vmatprep.mubr.f32.mxu0 0.0
        %1397 = vmatmul.mubr.f32.gmra.mrb[0].mxu0 %v1294
        %v1398 = vpop.f32.mrb[0].mxu0
        %v1399 = vadd.f32 0.0, %v1398
        %v1400 = vpop.f32.mrb[0].mxu0
        %1401 = vmatprep.mubr.f32.mxu0 0.0
        %1402 = vmatmul.mubr.f32.gmra.mrb[0].mxu0 %v1296
        %v1403 = vpop.f32.mrb[0].mxu0
        %v1404 = vadd.f32 0.0, %v1403
        %v1405 = vpop.f32.mrb[0].mxu0
        %1406 = vdwg.mxu0
        %v1407 = vrcp.pop %v1298
        %v1408 = vrcp.pop %v1300
        %v1409 = vrcp.pop %v1302
        %v1410 = vrcp.pop %v1304
        %v1411 = vmul.f32 %v1389, %v1407
        %v1412 = vmul.f32 %v1394, %v1408
        %v1413 = vmul.f32 %v1399, %v1409
        %v1414 = vmul.f32 %v1404, %v1410
        %v1415 = vmul.f32 %v962, 0.2
        %v1416 = vmul.f32 %v963, 0.2
        %v1417 = vmul.f32 %v964, 0.2
        %v1418 = vmul.f32 %v965, 0.2
        %v1419 = vmax.f32 %v962, %v1415
        %v1420 = vmax.f32 %v963, %v1416
        %v1421 = vmax.f32 %v964, %v1417
        %v1422 = vmax.f32 %v965, %v1418
        %v1423 = vadd.f32 %v1419, %v503
        %v1424 = vadd.f32 %v1420, %v504
        %v1425 = vadd.f32 %v1421, %v505
        %v1426 = vadd.f32 %v1422, %v506
        %1427 = vmax.xlane.f32.xlu0 %v1423
        %v1428 = vpop.xlane.xlu0 %1427
        %1429 = vmax.xlane.f32.xlu0 %v1424
        %v1430 = vpop.xlane.xlu0 %1429
        %1431 = vmax.xlane.f32.xlu0 %v1425
        %v1432 = vpop.xlane.xlu0 %1431
        %1433 = vmax.xlane.f32.xlu0 %v1426
        %v1434 = vpop.xlane.xlu0 %1433
        %v1435 = vsub.f32 %v1423, %v1428
        %v1436 = vsub.f32 %v1424, %v1430
        %v1437 = vsub.f32 %v1425, %v1432
        %v1438 = vsub.f32 %v1426, %v1434
        %v1439 = vmul.f32 %v1435, 1.442695
        %v1440 = vpow.pop %v1439
        %v1441 = vmul.f32 %v1436, 1.442695
        %v1442 = vpow.pop %v1441
        %v1443 = vmul.f32 %v1437, 1.442695
        %v1444 = vpow.pop %v1443
        %v1445 = vmul.f32 %v1438, 1.442695
        %v1446 = vpow.pop %v1445
        %1447 = vadd.xlane.f32.xlu0 %v1440
        %v1448 = vpop.xlane.xlu0 %1447
        %1449 = vadd.xlane.f32.xlu0 %v1442
        %v1450 = vpop.xlane.xlu0 %1449
        %1451 = vadd.xlane.f32.xlu0 %v1444
        %v1452 = vpop.xlane.xlu0 %1451
        %1453 = vadd.xlane.f32.xlu0 %v1446
        %v1454 = vpop.xlane.xlu0 %1453
        %s1455 = scalar_lea.vmem %s2, 384
        %v1456 = vld [vmem:[%s1455] sm:$0xff]
        %v1457 = vld [vmem:[%s1455 + $0x8] sm:$0xff]
        %v1458 = vld [vmem:[%s1455 + $0x10] sm:$0xff]
        %v1459 = vld [vmem:[%s1455 + $0x18] sm:$0xff]
        %v1460 = vld [vmem:[%s1455 + $0x20] sm:$0xff]
        %v1461 = vld [vmem:[%s1455 + $0x28] sm:$0xff]
        %v1462 = vld [vmem:[%s1455 + $0x30] sm:$0xff]
        %v1463 = vld [vmem:[%s1455 + $0x38] sm:$0xff]
        %v1464 = vld [vmem:[%s1455 + $0x40] sm:$0xff]
        %v1465 = vld [vmem:[%s1455 + $0x48] sm:$0xff]
        %v1466 = vld [vmem:[%s1455 + $0x50] sm:$0xff]
        %v1467 = vld [vmem:[%s1455 + $0x58] sm:$0xff]
        %v1468 = vld [vmem:[%s1455 + $0x60] sm:$0xff]
        %v1469 = vld [vmem:[%s1455 + $0x68] sm:$0xff]
        %v1470 = vld [vmem:[%s1455 + $0x70] sm:$0xff]
        %v1471 = vld [vmem:[%s1455 + $0x78] sm:$0xff]
        %1472 = vmatprep.subr.mxu0 0.0
        %1473 = vmatpush1.msra.mxu0 %v1456
        %1474 = vmatprep.subr.mxu0 0.0
        %1475 = vmatpush1.msra.mxu0 %v1457
        %1476 = vmatprep.subr.mxu0 0.0
        %1477 = vmatpush1.msra.mxu0 %v1458
        %1478 = vmatprep.subr.mxu0 0.0
        %1479 = vmatpush1.msra.mxu0 %v1459
        %1480 = vmatprep.subr.mxu0 0.0
        %1481 = vmatpush1.msra.mxu0 %v1460
        %1482 = vmatprep.subr.mxu0 0.0
        %1483 = vmatpush1.msra.mxu0 %v1461
        %1484 = vmatprep.subr.mxu0 0.0
        %1485 = vmatpush1.msra.mxu0 %v1462
        %1486 = vmatprep.subr.mxu0 0.0
        %1487 = vmatpush1.msra.mxu0 %v1463
        %1488 = vmatprep.subr.mxu0 0.0
        %1489 = vmatpush1.msra.mxu0 %v1464
        %1490 = vmatprep.subr.mxu0 0.0
        %1491 = vmatpush1.msra.mxu0 %v1465
        %1492 = vmatprep.subr.mxu0 0.0
        %1493 = vmatpush1.msra.mxu0 %v1466
        %1494 = vmatprep.subr.mxu0 0.0
        %1495 = vmatpush1.msra.mxu0 %v1467
        %1496 = vmatprep.subr.mxu0 0.0
        %1497 = vmatpush1.msra.mxu0 %v1468
        %1498 = vmatprep.subr.mxu0 0.0
        %1499 = vmatpush1.msra.mxu0 %v1469
        %1500 = vmatprep.subr.mxu0 0.0
        %1501 = vmatpush1.msra.mxu0 %v1470
        %1502 = vmatprep.subr.mxu0 0.0
        %1503 = vmatpush1.msra.mxu0 %v1471
        %1504 = vmatprep.subr.mxu0 0.0
        %1505 = vmatpush1.msra.mxu0 0.0
        %1506 = vmatprep.subr.mxu0 0.0
        %1507 = vmatpush1.msra.mxu0 0.0
        %1508 = vmatprep.subr.mxu0 0.0
        %1509 = vmatpush1.msra.mxu0 0.0
        %1510 = vmatprep.subr.mxu0 0.0
        %1511 = vmatpush1.msra.mxu0 0.0
        %1512 = vmatprep.subr.mxu0 0.0
        %1513 = vmatpush1.msra.mxu0 0.0
        %1514 = vmatprep.subr.mxu0 0.0
        %1515 = vmatpush1.msra.mxu0 0.0
        %1516 = vmatprep.subr.mxu0 0.0
        %1517 = vmatpush1.msra.mxu0 0.0
        %1518 = vmatprep.subr.mxu0 0.0
        %1519 = vmatpush1.msra.mxu0 0.0
        %1520 = vmatprep.subr.mxu0 0.0
        %1521 = vmatpush1.msra.mxu0 0.0
        %1522 = vmatprep.subr.mxu0 0.0
        %1523 = vmatpush1.msra.mxu0 0.0
        %1524 = vmatprep.subr.mxu0 0.0
        %1525 = vmatpush1.msra.mxu0 0.0
        %1526 = vmatprep.subr.mxu0 0.0
        %1527 = vmatpush1.msra.mxu0 0.0
        %1528 = vmatprep.subr.mxu0 0.0
        %1529 = vmatpush1.msra.mxu0 0.0
        %1530 = vmatprep.subr.mxu0 0.0
        %1531 = vmatpush1.msra.mxu0 0.0
        %1532 = vmatprep.subr.mxu0 0.0
        %1533 = vmatpush1.msra.mxu0 0.0
        %1534 = vmatprep.subr.mxu0 0.0
        %1535 = vmatpush1.msra.mxu0 0.0
        %1536 = vmatprep.mubr.f32.mxu0 0.0
        %1537 = vmatmul.mubr.f32.gmra.mrb[0].mxu0 %v1440
        %v1538 = vpop.f32.mrb[0].mxu0
        %v1539 = vadd.f32 0.0, %v1538
        %v1540 = vpop.f32.mrb[0].mxu0
        %1541 = vmatprep.mubr.f32.mxu0 0.0
        %1542 = vmatmul.mubr.f32.gmra.mrb[0].mxu0 %v1442
        %v1543 = vpop.f32.mrb[0].mxu0
        %v1544 = vadd.f32 0.0, %v1543
        %v1545 = vpop.f32.mrb[0].mxu0
        %1546 = vmatprep.mubr.f32.mxu0 0.0
        %1547 = vmatmul.mubr.f32.gmra.mrb[0].mxu0 %v1444
        %v1548 = vpop.f32.mrb[0].mxu0
        %v1549 = vadd.f32 0.0, %v1548
        %v1550 = vpop.f32.mrb[0].mxu0
        %1551 = vmatprep.mubr.f32.mxu0 0.0
        %1552 = vmatmul.mubr.f32.gmra.mrb[0].mxu0 %v1446
        %v1553 = vpop.f32.mrb[0].mxu0
        %v1554 = vadd.f32 0.0, %v1553
        %v1555 = vpop.f32.mrb[0].mxu0
        %1556 = vdwg.mxu0
        %v1557 = vrcp.pop %v1448
        %v1558 = vrcp.pop %v1450
        %v1559 = vrcp.pop %v1452
        %v1560 = vrcp.pop %v1454
        %v1561 = vmul.f32 %v1539, %v1557
        %v1562 = vmul.f32 %v1544, %v1558
        %v1563 = vmul.f32 %v1549, %v1559
        %v1564 = vmul.f32 %v1554, %v1560
        %1569 = vrot.lane.b32.xlu0 %v1261, 16
        %v1570 = vpop.permute.xlu0 %1569
        %1571 = vrot.lane.b32.xlu0 %v1262, 16
        %v1572 = vpop.permute.xlu0 %1571
        %1573 = vrot.lane.b32.xlu0 %v1263, 16
        %v1574 = vpop.permute.xlu0 %1573
        %1575 = vrot.lane.b32.xlu0 %v1264, 16
        %v1576 = vpop.permute.xlu0 %1575
        %1585 = vrot.lane.b32.xlu0 %v1411, 32
        %v1586 = vpop.permute.xlu0 %1585
        %1587 = vrot.lane.b32.xlu0 %v1412, 32
        %v1588 = vpop.permute.xlu0 %1587
        %1589 = vrot.lane.b32.xlu0 %v1413, 32
        %v1590 = vpop.permute.xlu0 %1589
        %1591 = vrot.lane.b32.xlu0 %v1414, 32
        %v1592 = vpop.permute.xlu0 %1591
        %1601 = vrot.lane.b32.xlu0 %v1561, 48
        %v1602 = vpop.permute.xlu0 %1601
        %1603 = vrot.lane.b32.xlu0 %v1562, 48
        %v1604 = vpop.permute.xlu0 %1603
        %1605 = vrot.lane.b32.xlu0 %v1563, 48
        %v1606 = vpop.permute.xlu0 %1605
        %1607 = vrot.lane.b32.xlu0 %v1564, 48
        %v1608 = vpop.permute.xlu0 %1607
        %vm1613 = vcmask 130048
        %v1614 = vsel %vm1613, %v1111, %v1570
        %v1615 = vsel %vm1613, %v1112, %v1572
        %v1616 = vsel %vm1613, %v1113, %v1574
        %v1617 = vsel %vm1613, %v1114, %v1576
        %vm1618 = vcmask 261120
        %v1619 = vsel %vm1618, %v1614, %v1586
        %v1620 = vsel %vm1618, %v1615, %v1588
        %v1621 = vsel %vm1618, %v1616, %v1590
        %v1622 = vsel %vm1618, %v1617, %v1592
        %vm1623 = vcmask 392192
        %v1624 = vsel %vm1623, %v1619, %v1602
        %v1625 = vsel %vm1623, %v1620, %v1604
        %v1626 = vsel %vm1623, %v1621, %v1606
        %v1627 = vsel %vm1623, %v1622, %v1608
        %vm1628 = vcmask 523264
        %v1629 = vsel %vm1628, %v1624, 0.0
        %v1630 = vsel %vm1628, %v1625, 0.0
        %v1631 = vsel %vm1628, %v1626, 0.0
        %v1632 = vsel %vm1628, %v1627, 0.0
        %v1633 = vld [vmem:[%s6] sm:$0x1]
        %v1635 = vlaneseq
        %v1636 = vshrl.u32 %v1635, 7
        %v1637 = vsub.s32 0, %v1636
        %v1638 = vrot.slane %v1633, %v1637
        %v1640 = vadd.f32 %v1629, %v1638
        %v1641 = vadd.f32 %v1630, %v1638
        %v1642 = vadd.f32 %v1631, %v1638
        %v1643 = vadd.f32 %v1632, %v1638
        %1644 = vst [vmem:[%s496] sm:$0xff] %v1640
        %1645 = vst [vmem:[%s496 + $0x8] sm:$0xff] %v1641
        %1646 = vst [vmem:[%s496 + $0x10] sm:$0xff] %v1642
        %1647 = vst [vmem:[%s496 + $0x18] sm:$0xff] %v1643
        %s1648 = smul.u32 4, %s19
        %p1649 = scmp.lt.s32.totalorder %s1648, 7
        %s1650 = scalar_select %p1649, %s1648, 7
        %s1651 = smul.addr %s1650, 8
        %s1652 = scalar_lea.vmem %s7, %s1651
        // Predicated region
        $region91: #{gat_forward.1} parent=81 // pred_check
          %p1653 = pneg %p199
        $region92: #{gat_forward.1} parent=81 // pred_check_branch
          %1655 = sbr.rel (%p1653) target = $region94
        $region93: #{gat_forward.1} parent=81 // pred_region
          %s1656 = smul.u32 4, %s19
        $region94: #{gat_forward.1} parent=81 // pred_fallthru
          _
      $region82: #{gat_forward.1} parent=5 // pred_fallthru
        _
      %p1657 = scmp.le.s32.totalorder 2, %s14
      // Predicated region
      $region95: #{gat_forward.1} parent=5 // pred_check
        %p1658 = pneg %p1657
      $region96: #{gat_forward.1} parent=5 // pred_check_branch
        %1660 = sbr.rel (%p1658) target = $region98
      $region97: #{gat_forward.1} parent=5 // pred_region
        %s1661 = ssub.s32 %s14, 2
        // Predicated region
        $region99: #{gat_forward.1} parent=97 // pred_check
          %p1662 = pneg %p205
        $region100: #{gat_forward.1} parent=97 // pred_check_branch
          %1664 = sbr.rel (%p1662) target = $region102
        $region101: #{gat_forward.1} parent=97 // pred_region
          %s1665 = smul.u32 4, %s20
          %p1666 = scmp.lt.s32.totalorder %s1665, 7
          %s1667 = scalar_select %p1666, %s1665, 7
          %s1668 = smul.addr %s1667, 8
          %s1669 = scalar_lea.vmem %s7, %s1668
        $region102: #{gat_forward.1} parent=97 // pred_fallthru
          _
      $region98: #{gat_forward.1} parent=5 // pred_fallthru
        _
    $region6: #{gat_forward.1} parent=1 // loop_footer
      %s18 = sadd.s32 1, %s14
    $region7: #{gat_forward.1} parent=1 // loop_footer_branch
      %13 = sbr.rel target = $region3
    $region8: #{gat_forward.1} parent=1 // loop_exit
      _
    %1670 = vsyncpa [#allocation4], 1
    %s1671 = scalar_lea.sflag [#allocation4], 1
    %1672 = vsyncpa %s1671, 1

</llo_original>
